<compile_context>
chip_gen: v7x
topology: tpu7x:2x2x1
jax: 0.10.0
libtpu: 0.0.40
codegen_flags: <defaults>
</compile_context>

<pallas_src>
import jax
import jax.numpy as jnp
from jax import lax
from jax.experimental import pallas as pl
from jax.experimental.pallas import tpu as pltpu
import numpy as np


# ----------------------------------------------------------------------------
# Fused kernel: bidirectional GRU + 6-head attention pooling
# ----------------------------------------------------------------------------
def fused_kernel(x_ref, wih_ref, gib_ref, whh_ref, bhhn_ref,
                 attw_ref, attb_ref, qflat_ref,
                 doc_ref, hn_ref, f_scr):
    # x_ref    : (S*B, Hin)  time-major rows (t*B + b)
    # wih_ref  : (Hin, 6G)   W_ih.T, columns [r_f r_b | z_f z_b | n_f n_b]
    # gib_ref  : (1, 6G)     b_ih (+ b_hh for r,z gates), same column layout
    # whh_ref  : (2G, 6G)    block-diagonal W_hh.T, rows = [h_f | h_b]
    # bhhn_ref : (1, 6G)     b_hh of the n gate in the n-lane slab, 0 elsewhere
    # attw_ref : (H, 6H)     6 attention first-linear weights (transposed), concat
    # attb_ref : (1, 6H)     6 attention first-linear biases, concat
    # qflat_ref: (1, 6H)     [v, query_emb[0..4]] flattened per head block
    # doc_ref  : (B, H)      doc_vector output
    # hn_ref   : (2, B, G)   h_n output (final fwd / bwd hidden states)
    # f_scr    : (S*B, H)    bidirectional GRU outputs, time-major rows (scratch)
    B = hn_ref.shape[1]
    G = hn_ref.shape[2]
    H = 2 * G
    S = f_scr.shape[0] // B

    # ---- hoisted GRU input projection: every timestep, both dirs, all gates.
    gi = jnp.dot(x_ref[...], wih_ref[...],
                 preferred_element_type=jnp.float32) + gib_ref[...]   # (S*B, 6G)
    gi_rows = [gi[t * B:(t + 1) * B, :] for t in range(S)]            # S x (B, 6G)

    # Lanes owned by the forward direction in the step-aligned gate layout.
    lane = lax.broadcasted_iota(jnp.int32, (1, 6 * G), 1)
    fwd_lane = (lane % (2 * G)) < G                                   # (1, 6G) bool

    whh = whh_ref[...]
    bhhn = bhhn_ref[...]

    # Both directions advance in the same fully-unrolled loop (S is static and
    # small; switch to lax.fori_loop(..., unroll=2..4) if S grows).
    h = jnp.zeros((B, H), jnp.float32)          # carried as [h_f | h_b]
    for i in range(S):
        tf, tb = i, S - 1 - i
        # one recurrent dot per step for both directions & all three gates
        gh = jnp.dot(h, whh, preferred_element_type=jnp.float32) + bhhn
        # fwd gates read x[tf], bwd gates read x[tb]: one lane-masked select
        a = jnp.where(fwd_lane, gi_rows[tf], gi_rows[tb])             # (B, 6G)
        rz = jax.nn.sigmoid(a[:, :4 * G] + gh[:, :4 * G])             # r|z slab
        r = rz[:, :2 * G]
        z = rz[:, 2 * G:]
        n = jnp.tanh(a[:, 4 * G:] + r * gh[:, 4 * G:])
        h = (1.0 - z) * n + z * h
        # time-major slab stores: fwd half at row-block tf, bwd half at tb
        f_scr[tf * B:(tf + 1) * B, 0:G] = h[:, 0:G]
        f_scr[tb * B:(tb + 1) * B, G:H] = h[:, G:H]

    hn_ref[0] = h[:, 0:G]
    hn_ref[1] = h[:, G:H]

    # ---- 6-head attention pooling, heads batched along lanes.
    ff = f_scr[...]                                                    # (S*B, H)
    hk = jnp.tanh(jnp.dot(ff, attw_ref[...],
                          preferred_element_type=jnp.float32) + attb_ref[...])
    # query/context dot on the VPU (the old selector matmul was ~97% zeros)
    hkq = hk * qflat_ref[...]                                          # (S*B, 6H)
    logits = jnp.concatenate(
        [jnp.sum(hkq[:, k * H:(k + 1) * H], axis=-1, keepdims=True)
         for k in range(6)], axis=-1)                                  # (S*B, 6)
    logits = logits.reshape(S, B, 6)
    m = jnp.max(logits, axis=0, keepdims=True)                         # softmax over S,
    e = jnp.exp(logits - m)                                            # all 6 heads at once
    alpha = e / jnp.sum(e, axis=0, keepdims=True)                      # (S, B, 6)
    w = jnp.sum(alpha, axis=2) * (1.0 / 6.0)                           # (S, B)
    doc_ref[...] = jnp.sum(w[:, :, None] * ff.reshape(S, B, H), axis=0)


# ----------------------------------------------------------------------------
# One-time parameter re-layout (PyTorch-style -> fused-kernel format)
# ----------------------------------------------------------------------------
def pack_params(params):
    wih_t, whh_t = params["wih_t"], params["whh_t"]   # (2, Hin, 3G), (2, G, 3G)
    bih, bhh = params["bih"], params["bhh"]           # (2, 3G)
    G = whh_t.shape[1]

    # Step-aligned gate-major column layout: [r_f r_b | z_f z_b | n_f n_b].
    wih_cols, gib_cols = [], []
    for g in range(3):                  # PyTorch gate order r, z, n
        for d in range(2):              # direction fwd, bwd
            wih_cols.append(wih_t[d][:, g * G:(g + 1) * G])
            b = bih[d, g * G:(g + 1) * G]
            if g < 2:                   # fold b_hh for r and z gates
                b = b + bhh[d, g * G:(g + 1) * G]
            gib_cols.append(b)
    wih_pk = jnp.concatenate(wih_cols, axis=1)                 # (Hin, 6G)
    gib_pk = jnp.concatenate(gib_cols)[None, :]                # (1, 6G)

    # Block-diagonal recurrent weight: rows = [h_f | h_b], cols as above.
    whh_bd = jnp.zeros((2 * G, 6 * G), jnp.float32)
    for g in range(3):
        for d in range(2):
            col = (2 * g + d) * G
            whh_bd = whh_bd.at[d * G:(d + 1) * G, col:col + G].set(
                whh_t[d][:, g * G:(g + 1) * G])

    # b_hh of the n gate, padded into the n-lane slab (zeros elsewhere).
    bhhn_pad = jnp.zeros((1, 6 * G), jnp.float32)
    bhhn_pad = bhhn_pad.at[0, 4 * G:5 * G].set(bhh[0, 2 * G:3 * G])
    bhhn_pad = bhhn_pad.at[0, 5 * G:6 * G].set(bhh[1, 2 * G:3 * G])

    attw_pk = jnp.concatenate([params["att_w_t"][k] for k in range(6)], axis=1)  # (H, 6H)
    attb_pk = jnp.concatenate([params["att_b"][k] for k in range(6)])[None, :]   # (1, 6H)

    return {"wih": wih_pk, "gib": gib_pk, "whh": whh_bd, "bhhn": bhhn_pad,
            "attw": attw_pk, "attb": attb_pk, "v": params["v"]}


# ----------------------------------------------------------------------------
# Module forward: one pallas_call
# ----------------------------------------------------------------------------
def sent_att_net_forward(x, query_emb, packed):
    B, S, Hin = x.shape
    G = packed["whh"].shape[0] // 2
    H = 2 * G

    # head 0 = att_net's v vector, heads 1..5 = the 5 query embeddings
    q_stack = jnp.concatenate([packed["v"][None, :], query_emb], axis=0)   # (6, H)
    qflat = q_stack.reshape(1, 6 * H)

    # time-major rows t*B + b so the in-kernel recurrence is leading-axis indexed
    x_tm = jnp.transpose(x, (1, 0, 2)).reshape(S * B, Hin)

    vmem = pl.BlockSpec(memory_space=pltpu.MemorySpace.VMEM)
    # TODO(synk): on v7x (2 TensorCores) or at larger B / BERT-sized Hin, add a
    # batch grid (grid=(B//tb,), per-batch BlockSpecs, dimension_semantics=
    # ("parallel",)) so the work is core-parallel and VMEM-tiled; at B=2 on
    # single-core v5e/v6e a batch grid would only serialize the GRU chain.
    doc, h_n = pl.pallas_call(
        fused_kernel,
        out_shape=(jax.ShapeDtypeStruct((B, H), jnp.float32),
                   jax.ShapeDtypeStruct((2, B, G), jnp.float32)),
        in_specs=[vmem] * 8,
        out_specs=(vmem, vmem),
        scratch_shapes=[pltpu.VMEM((S * B, H), jnp.float32)],
    )(x_tm, packed["wih"], packed["gib"], packed["whh"], packed["bhhn"],
      packed["attw"], packed["attb"], qflat)
    return doc, h_n


# ----------------------------------------------------------------------------
# Pure-JAX reference (for correctness check)
# ----------------------------------------------------------------------------
def ref_forward(x, query_emb, params):
    wih_t, whh_t = params["wih_t"], params["whh_t"]
    bih, bhh = params["bih"], params["bhh"]
    B, S, Hin = x.shape
    Hh = whh_t.shape[1]

    def cell(x_t, h, d):
        gi = x_t @ wih_t[d] + bih[d]
        gh = h @ whh_t[d] + bhh[d]
        r = jax.nn.sigmoid(gi[:, :Hh] + gh[:, :Hh])
        z = jax.nn.sigmoid(gi[:, Hh:2 * Hh] + gh[:, Hh:2 * Hh])
        n = jnp.tanh(gi[:, 2 * Hh:] + r * gh[:, 2 * Hh:])
        return (1.0 - z) * n + z * h

    x_sbh = jnp.transpose(x, (1, 0, 2))
    h0 = jnp.zeros((B, Hh), jnp.float32)
    h_f, ys_f = lax.scan(lambda h, xt: (cell(xt, h, 0),) * 2, h0, x_sbh)
    h_b, ys_b = lax.scan(lambda h, xt: (cell(xt, h, 1),) * 2, h0, x_sbh[::-1])
    ys_b = ys_b[::-1]
    f = jnp.transpose(jnp.concatenate([ys_f, ys_b], axis=-1), (1, 0, 2))
    hn = jnp.stack([h_f, h_b], axis=0)

    q_stack = jnp.concatenate([params["v"][None, :], query_emb], axis=0)
    alphas = []
    for k in range(6):
        hk = jnp.tanh(f @ params["att_w_t"][k] + params["att_b"][k])
        logits = jnp.sum(hk * q_stack[k], axis=-1)
        alphas.append(jax.nn.softmax(logits, axis=1))
    alpha_mean = sum(alphas) / 6.0
    doc = jnp.sum(alpha_mean[:, :, None] * f, axis=1)
    return doc, hn


# ----------------------------------------------------------------------------
# Deterministic parameter init (PyTorch-style uniform ranges)
# ----------------------------------------------------------------------------
def init_params(key, hidden_size):
    Hh = hidden_size // 2        # GRU hidden per direction
    H = hidden_size              # = 2 * Hh
    ks = jax.random.split(key, 16)
    u = lambda k, shape, bound: jax.random.uniform(
        k, shape, jnp.float32, minval=-bound, maxval=bound)

    gb = 1.0 / np.sqrt(Hh)
    params = {
        # GRU weights, pre-transposed to (in, out), stacked over direction,
        # gate order [r, z, n] like PyTorch.
        "wih_t": u(ks[0], (2, H, 3 * Hh), gb),
        "whh_t": u(ks[1], (2, Hh, 3 * Hh), gb),
        "bih": u(ks[2], (2, 3 * Hh), gb),
        "bhh": u(ks[3], (2, 3 * Hh), gb),
    }
    lb = 1.0 / np.sqrt(H)
    # 6 first-linears: att_net[0], att_net_1..5[0]; pre-transposed (in, out).
    params["att_w_t"] = u(ks[4], (6, H, H), lb)
    params["att_b"] = u(ks[5], (6, H), lb)
    # att_net[2]: Linear(H -> 1, bias=False); weight row of shape (H,)
    params["v"] = u(ks[6], (H,), lb)
    return params


if __name__ == "__main__":
    hidden_size = 32         # config.hidden_size
    B, S = 2, 8              # batch, number of sentences

    key = jax.random.PRNGKey(0)
    k_p, k_x, k_q = jax.random.split(key, 3)
    params = init_params(k_p, hidden_size)
    packed = pack_params(params)          # one-time weight re-layout

    x = jax.random.normal(k_x, (B, S, hidden_size), jnp.float32)          # input
    query_emb = jax.random.normal(k_q, (5, hidden_size), jnp.float32)     # 5 query vectors

    fwd = jax.jit(sent_att_net_forward)
    doc_vector, h_output = fwd(x, query_emb, packed)
    jax.block_until_ready((doc_vector, h_output))

    doc_ref, hn_expected = ref_forward(x, query_emb, params)
    assert doc_vector.shape == (B, hidden_size)
    assert h_output.shape == (2, B, hidden_size // 2)
    assert np.max(np.abs(np.asarray(doc_vector) - np.asarray(doc_ref))) < 1e-3
    assert np.max(np.abs(np.asarray(h_output) - np.asarray(hn_expected))) < 1e-3

    print("KERNEL_OK")
</pallas_src>

<mosaic_0001>
module attributes {stable_mosaic.version = 11 : i64} {
  func.func @fused_kernel(%arg0: memref<16x32xf32, #tpu.memory_space<vmem>>, %arg1: memref<32x96xf32, #tpu.memory_space<vmem>>, %arg2: memref<1x96xf32, #tpu.memory_space<vmem>>, %arg3: memref<32x96xf32, #tpu.memory_space<vmem>>, %arg4: memref<1x96xf32, #tpu.memory_space<vmem>>, %arg5: memref<32x192xf32, #tpu.memory_space<vmem>>, %arg6: memref<1x192xf32, #tpu.memory_space<vmem>>, %arg7: memref<1x192xf32, #tpu.memory_space<vmem>>, %arg8: memref<2x32xf32, #tpu.memory_space<vmem>>, %arg9: memref<2x2x16xf32, #tpu.memory_space<vmem>>, %arg10: memref<16x32xf32, #tpu.memory_space<vmem>>) attributes {dimension_semantics = [], scalar_prefetch = 0 : i64, scratch_operands = 1 : i64, tpu.core_type = #tpu.core_type<tc>} {
    %c0 = arith.constant 0 : index
    %c0_0 = arith.constant 0 : index
    %0 = vector.load %arg0[%c0, %c0_0] : memref<16x32xf32, #tpu.memory_space<vmem>>, vector<16x32xf32>
    %c0_1 = arith.constant 0 : index
    %c0_2 = arith.constant 0 : index
    %1 = vector.load %arg1[%c0_1, %c0_2] : memref<32x96xf32, #tpu.memory_space<vmem>>, vector<32x96xf32>
    %cst = arith.constant dense<0.000000e+00> : vector<16x96xf32>
    %2 = tpu.matmul %0, %1, %cst {dimension_numbers = #tpu.dot_dimension_numbers<[1], [0], [0], [1], [0, 0, 1, 1], [], []>} : vector<16x32xf32>, vector<32x96xf32>, vector<16x96xf32> -> vector<16x96xf32>
    %c0_3 = arith.constant 0 : index
    %c0_4 = arith.constant 0 : index
    %3 = vector.load %arg2[%c0_3, %c0_4] : memref<1x96xf32, #tpu.memory_space<vmem>>, vector<1x96xf32>
    %4 = vector.broadcast %3 : vector<1x96xf32> to vector<16x96xf32>
    %5 = arith.addf %2, %4 : vector<16x96xf32>
    %6 = vector.extract_strided_slice %5 {offsets = [0, 0], sizes = [2, 96], strides = [1, 1]} : vector<16x96xf32> to vector<2x96xf32>
    %7 = vector.extract_strided_slice %5 {offsets = [2, 0], sizes = [2, 96], strides = [1, 1]} : vector<16x96xf32> to vector<2x96xf32>
    %8 = vector.extract_strided_slice %5 {offsets = [4, 0], sizes = [2, 96], strides = [1, 1]} : vector<16x96xf32> to vector<2x96xf32>
    %9 = vector.extract_strided_slice %5 {offsets = [6, 0], sizes = [2, 96], strides = [1, 1]} : vector<16x96xf32> to vector<2x96xf32>
    %10 = vector.extract_strided_slice %5 {offsets = [8, 0], sizes = [2, 96], strides = [1, 1]} : vector<16x96xf32> to vector<2x96xf32>
    %11 = vector.extract_strided_slice %5 {offsets = [10, 0], sizes = [2, 96], strides = [1, 1]} : vector<16x96xf32> to vector<2x96xf32>
    %12 = vector.extract_strided_slice %5 {offsets = [12, 0], sizes = [2, 96], strides = [1, 1]} : vector<16x96xf32> to vector<2x96xf32>
    %13 = vector.extract_strided_slice %5 {offsets = [14, 0], sizes = [2, 96], strides = [1, 1]} : vector<16x96xf32> to vector<2x96xf32>
    %14 = tpu.iota {dimensions = array<i32: 1>} : vector<1x96xi32>
    %c32_i32 = arith.constant 32 : i32
    %c0_i32 = arith.constant 0 : i32
    %15 = arith.cmpi eq, %c32_i32, %c0_i32 : i32
    %c1_i32 = arith.constant 1 : i32
    %16 = arith.select %15, %c1_i32, %c32_i32 : i32
    %17 = vector.broadcast %16 : i32 to vector<1x96xi32>
    %18 = arith.remsi %14, %17 : vector<1x96xi32>
    %c0_i32_5 = arith.constant 0 : i32
    %19 = vector.broadcast %c0_i32_5 : i32 to vector<1x96xi32>
    %20 = arith.cmpi ne, %18, %19 : vector<1x96xi32>
    %c0_i32_6 = arith.constant 0 : i32
    %21 = vector.broadcast %c0_i32_6 : i32 to vector<1x96xi32>
    %22 = arith.cmpi slt, %18, %21 : vector<1x96xi32>
    %c0_i32_7 = arith.constant 0 : i32
    %23 = arith.cmpi slt, %16, %c0_i32_7 : i32
    %24 = vector.broadcast %23 : i1 to vector<1x96xi1>
    %25 = vector.broadcast %24 : vector<1x96xi1> to vector<1x96xi1>
    %26 = arith.xori %22, %25 : vector<1x96xi1>
    %27 = arith.andi %26, %20 : vector<1x96xi1>
    %28 = vector.broadcast %16 : i32 to vector<1x96xi32>
    %29 = arith.addi %18, %28 : vector<1x96xi32>
    %30 = arith.select %27, %29, %18 : vector<1x96xi1>, vector<1x96xi32>
    %c16_i32 = arith.constant 16 : i32
    %31 = vector.broadcast %c16_i32 : i32 to vector<1x96xi32>
    %32 = arith.cmpi slt, %30, %31 : vector<1x96xi32>
    %c0_8 = arith.constant 0 : index
    %c0_9 = arith.constant 0 : index
    %33 = vector.load %arg3[%c0_8, %c0_9] : memref<32x96xf32, #tpu.memory_space<vmem>>, vector<32x96xf32>
    %c0_10 = arith.constant 0 : index
    %c0_11 = arith.constant 0 : index
    %34 = vector.load %arg4[%c0_10, %c0_11] : memref<1x96xf32, #tpu.memory_space<vmem>>, vector<1x96xf32>
    %cst_12 = arith.constant 0.000000e+00 : f32
    %35 = vector.broadcast %cst_12 : f32 to vector<2x32xf32>
    %cst_13 = arith.constant dense<0.000000e+00> : vector<2x96xf32>
    %36 = tpu.matmul %35, %33, %cst_13 {dimension_numbers = #tpu.dot_dimension_numbers<[1], [0], [0], [1], [0, 0, 1, 1], [], []>} : vector<2x32xf32>, vector<32x96xf32>, vector<2x96xf32> -> vector<2x96xf32>
    %37 = vector.broadcast %34 : vector<1x96xf32> to vector<2x96xf32>
    %38 = arith.addf %36, %37 : vector<2x96xf32>
    %39 = vector.shape_cast %32 : vector<1x96xi1> to vector<1x96xi1>
    %40 = vector.broadcast %39 : vector<1x96xi1> to vector<2x96xi1>
    %41 = arith.select %40, %6, %13 : vector<2x96xi1>, vector<2x96xf32>
    %42 = vector.extract_strided_slice %41 {offsets = [0, 0], sizes = [2, 64], strides = [1, 1]} : vector<2x96xf32> to vector<2x64xf32>
    %43 = vector.extract_strided_slice %38 {offsets = [0, 0], sizes = [2, 64], strides = [1, 1]} : vector<2x96xf32> to vector<2x64xf32>
    %44 = arith.addf %42, %43 : vector<2x64xf32>
    %45 = arith.negf %44 : vector<2x64xf32>
    %46 = math.exp %45 : vector<2x64xf32>
    %cst_14 = arith.constant 1.000000e+00 : f32
    %47 = vector.broadcast %cst_14 : f32 to vector<2x64xf32>
    %48 = arith.addf %47, %46 : vector<2x64xf32>
    %49 = arith.divf %47, %48 : vector<2x64xf32>
    %50 = vector.extract_strided_slice %49 {offsets = [0, 0], sizes = [2, 32], strides = [1, 1]} : vector<2x64xf32> to vector<2x32xf32>
    %51 = vector.extract_strided_slice %49 {offsets = [0, 32], sizes = [2, 32], strides = [1, 1]} : vector<2x64xf32> to vector<2x32xf32>
    %52 = vector.extract_strided_slice %41 {offsets = [0, 64], sizes = [2, 32], strides = [1, 1]} : vector<2x96xf32> to vector<2x32xf32>
    %53 = vector.extract_strided_slice %38 {offsets = [0, 64], sizes = [2, 32], strides = [1, 1]} : vector<2x96xf32> to vector<2x32xf32>
    %54 = arith.mulf %50, %53 : vector<2x32xf32>
    %55 = arith.addf %52, %54 : vector<2x32xf32>
    %56 = math.tanh %55 : vector<2x32xf32>
    %cst_15 = arith.constant 1.000000e+00 : f32
    %57 = vector.broadcast %cst_15 : f32 to vector<2x32xf32>
    %58 = arith.subf %57, %51 : vector<2x32xf32>
    %59 = arith.mulf %58, %56 : vector<2x32xf32>
    %60 = arith.mulf %51, %35 : vector<2x32xf32>
    %61 = arith.addf %59, %60 : vector<2x32xf32>
    %62 = vector.extract_strided_slice %61 {offsets = [0, 0], sizes = [2, 16], strides = [1, 1]} : vector<2x32xf32> to vector<2x16xf32>
    %c0_16 = arith.constant 0 : index
    %c0_17 = arith.constant 0 : index
    %63 = vector.load %arg10[%c0_16, %c0_17] : memref<16x32xf32, #tpu.memory_space<vmem>>, vector<2x16xf32>
    tpu.vector_store %arg10[%c0_16, %c0_17], %62 {strides = array<i32>} : memref<16x32xf32, #tpu.memory_space<vmem>>, vector<2x16xf32>,
    %64 = vector.extract_strided_slice %61 {offsets = [0, 16], sizes = [2, 16], strides = [1, 1]} : vector<2x32xf32> to vector<2x16xf32>
    %c14 = arith.constant 14 : index
    %c16 = arith.constant 16 : index
    %65 = vector.load %arg10[%c14, %c16] : memref<16x32xf32, #tpu.memory_space<vmem>>, vector<2x16xf32>
    tpu.vector_store %arg10[%c14, %c16], %64 {strides = array<i32>} : memref<16x32xf32, #tpu.memory_space<vmem>>, vector<2x16xf32>,
    %cst_18 = arith.constant dense<0.000000e+00> : vector<2x96xf32>
    %66 = tpu.matmul %61, %33, %cst_18 {dimension_numbers = #tpu.dot_dimension_numbers<[1], [0], [0], [1], [0, 0, 1, 1], [], []>} : vector<2x32xf32>, vector<32x96xf32>, vector<2x96xf32> -> vector<2x96xf32>
    %67 = vector.broadcast %34 : vector<1x96xf32> to vector<2x96xf32>
    %68 = arith.addf %66, %67 : vector<2x96xf32>
    %69 = vector.shape_cast %32 : vector<1x96xi1> to vector<1x96xi1>
    %70 = vector.broadcast %69 : vector<1x96xi1> to vector<2x96xi1>
    %71 = arith.select %70, %7, %12 : vector<2x96xi1>, vector<2x96xf32>
    %72 = vector.extract_strided_slice %71 {offsets = [0, 0], sizes = [2, 64], strides = [1, 1]} : vector<2x96xf32> to vector<2x64xf32>
    %73 = vector.extract_strided_slice %68 {offsets = [0, 0], sizes = [2, 64], strides = [1, 1]} : vector<2x96xf32> to vector<2x64xf32>
    %74 = arith.addf %72, %73 : vector<2x64xf32>
    %75 = arith.negf %74 : vector<2x64xf32>
    %76 = math.exp %75 : vector<2x64xf32>
    %cst_19 = arith.constant 1.000000e+00 : f32
    %77 = vector.broadcast %cst_19 : f32 to vector<2x64xf32>
    %78 = arith.addf %77, %76 : vector<2x64xf32>
    %79 = arith.divf %77, %78 : vector<2x64xf32>
    %80 = vector.extract_strided_slice %79 {offsets = [0, 0], sizes = [2, 32], strides = [1, 1]} : vector<2x64xf32> to vector<2x32xf32>
    %81 = vector.extract_strided_slice %79 {offsets = [0, 32], sizes = [2, 32], strides = [1, 1]} : vector<2x64xf32> to vector<2x32xf32>
    %82 = vector.extract_strided_slice %71 {offsets = [0, 64], sizes = [2, 32], strides = [1, 1]} : vector<2x96xf32> to vector<2x32xf32>
    %83 = vector.extract_strided_slice %68 {offsets = [0, 64], sizes = [2, 32], strides = [1, 1]} : vector<2x96xf32> to vector<2x32xf32>
    %84 = arith.mulf %80, %83 : vector<2x32xf32>
    %85 = arith.addf %82, %84 : vector<2x32xf32>
    %86 = math.tanh %85 : vector<2x32xf32>
    %cst_20 = arith.constant 1.000000e+00 : f32
    %87 = vector.broadcast %cst_20 : f32 to vector<2x32xf32>
    %88 = arith.subf %87, %81 : vector<2x32xf32>
    %89 = arith.mulf %88, %86 : vector<2x32xf32>
    %90 = arith.mulf %81, %61 : vector<2x32xf32>
    %91 = arith.addf %89, %90 : vector<2x32xf32>
    %92 = vector.extract_strided_slice %91 {offsets = [0, 0], sizes = [2, 16], strides = [1, 1]} : vector<2x32xf32> to vector<2x16xf32>
    %c2 = arith.constant 2 : index
    %c0_21 = arith.constant 0 : index
    %93 = vector.load %arg10[%c2, %c0_21] : memref<16x32xf32, #tpu.memory_space<vmem>>, vector<2x16xf32>
    tpu.vector_store %arg10[%c2, %c0_21], %92 {strides = array<i32>} : memref<16x32xf32, #tpu.memory_space<vmem>>, vector<2x16xf32>,
    %94 = vector.extract_strided_slice %91 {offsets = [0, 16], sizes = [2, 16], strides = [1, 1]} : vector<2x32xf32> to vector<2x16xf32>
    %c12 = arith.constant 12 : index
    %c16_22 = arith.constant 16 : index
    %95 = vector.load %arg10[%c12, %c16_22] : memref<16x32xf32, #tpu.memory_space<vmem>>, vector<2x16xf32>
    tpu.vector_store %arg10[%c12, %c16_22], %94 {strides = array<i32>} : memref<16x32xf32, #tpu.memory_space<vmem>>, vector<2x16xf32>,
    %cst_23 = arith.constant dense<0.000000e+00> : vector<2x96xf32>
    %96 = tpu.matmul %91, %33, %cst_23 {dimension_numbers = #tpu.dot_dimension_numbers<[1], [0], [0], [1], [0, 0, 1, 1], [], []>} : vector<2x32xf32>, vector<32x96xf32>, vector<2x96xf32> -> vector<2x96xf32>
    %97 = vector.broadcast %34 : vector<1x96xf32> to vector<2x96xf32>
    %98 = arith.addf %96, %97 : vector<2x96xf32>
    %99 = vector.shape_cast %32 : vector<1x96xi1> to vector<1x96xi1>
    %100 = vector.broadcast %99 : vector<1x96xi1> to vector<2x96xi1>
    %101 = arith.select %100, %8, %11 : vector<2x96xi1>, vector<2x96xf32>
    %102 = vector.extract_strided_slice %101 {offsets = [0, 0], sizes = [2, 64], strides = [1, 1]} : vector<2x96xf32> to vector<2x64xf32>
    %103 = vector.extract_strided_slice %98 {offsets = [0, 0], sizes = [2, 64], strides = [1, 1]} : vector<2x96xf32> to vector<2x64xf32>
    %104 = arith.addf %102, %103 : vector<2x64xf32>
    %105 = arith.negf %104 : vector<2x64xf32>
    %106 = math.exp %105 : vector<2x64xf32>
    %cst_24 = arith.constant 1.000000e+00 : f32
    %107 = vector.broadcast %cst_24 : f32 to vector<2x64xf32>
    %108 = arith.addf %107, %106 : vector<2x64xf32>
    %109 = arith.divf %107, %108 : vector<2x64xf32>
    %110 = vector.extract_strided_slice %109 {offsets = [0, 0], sizes = [2, 32], strides = [1, 1]} : vector<2x64xf32> to vector<2x32xf32>
    %111 = vector.extract_strided_slice %109 {offsets = [0, 32], sizes = [2, 32], strides = [1, 1]} : vector<2x64xf32> to vector<2x32xf32>
    %112 = vector.extract_strided_slice %101 {offsets = [0, 64], sizes = [2, 32], strides = [1, 1]} : vector<2x96xf32> to vector<2x32xf32>
    %113 = vector.extract_strided_slice %98 {offsets = [0, 64], sizes = [2, 32], strides = [1, 1]} : vector<2x96xf32> to vector<2x32xf32>
    %114 = arith.mulf %110, %113 : vector<2x32xf32>
    %115 = arith.addf %112, %114 : vector<2x32xf32>
    %116 = math.tanh %115 : vector<2x32xf32>
    %cst_25 = arith.constant 1.000000e+00 : f32
    %117 = vector.broadcast %cst_25 : f32 to vector<2x32xf32>
    %118 = arith.subf %117, %111 : vector<2x32xf32>
    %119 = arith.mulf %118, %116 : vector<2x32xf32>
    %120 = arith.mulf %111, %91 : vector<2x32xf32>
    %121 = arith.addf %119, %120 : vector<2x32xf32>
    %122 = vector.extract_strided_slice %121 {offsets = [0, 0], sizes = [2, 16], strides = [1, 1]} : vector<2x32xf32> to vector<2x16xf32>
    %c4 = arith.constant 4 : index
    %c0_26 = arith.constant 0 : index
    %123 = vector.load %arg10[%c4, %c0_26] : memref<16x32xf32, #tpu.memory_space<vmem>>, vector<2x16xf32>
    tpu.vector_store %arg10[%c4, %c0_26], %122 {strides = array<i32>} : memref<16x32xf32, #tpu.memory_space<vmem>>, vector<2x16xf32>,
    %124 = vector.extract_strided_slice %121 {offsets = [0, 16], sizes = [2, 16], strides = [1, 1]} : vector<2x32xf32> to vector<2x16xf32>
    %c10 = arith.constant 10 : index
    %c16_27 = arith.constant 16 : index
    %125 = vector.load %arg10[%c10, %c16_27] : memref<16x32xf32, #tpu.memory_space<vmem>>, vector<2x16xf32>
    tpu.vector_store %arg10[%c10, %c16_27], %124 {strides = array<i32>} : memref<16x32xf32, #tpu.memory_space<vmem>>, vector<2x16xf32>,
    %cst_28 = arith.constant dense<0.000000e+00> : vector<2x96xf32>
    %126 = tpu.matmul %121, %33, %cst_28 {dimension_numbers = #tpu.dot_dimension_numbers<[1], [0], [0], [1], [0, 0, 1, 1], [], []>} : vector<2x32xf32>, vector<32x96xf32>, vector<2x96xf32> -> vector<2x96xf32>
    %127 = vector.broadcast %34 : vector<1x96xf32> to vector<2x96xf32>
    %128 = arith.addf %126, %127 : vector<2x96xf32>
    %129 = vector.shape_cast %32 : vector<1x96xi1> to vector<1x96xi1>
    %130 = vector.broadcast %129 : vector<1x96xi1> to vector<2x96xi1>
    %131 = arith.select %130, %9, %10 : vector<2x96xi1>, vector<2x96xf32>
    %132 = vector.extract_strided_slice %131 {offsets = [0, 0], sizes = [2, 64], strides = [1, 1]} : vector<2x96xf32> to vector<2x64xf32>
    %133 = vector.extract_strided_slice %128 {offsets = [0, 0], sizes = [2, 64], strides = [1, 1]} : vector<2x96xf32> to vector<2x64xf32>
    %134 = arith.addf %132, %133 : vector<2x64xf32>
    %135 = arith.negf %134 : vector<2x64xf32>
    %136 = math.exp %135 : vector<2x64xf32>
    %cst_29 = arith.constant 1.000000e+00 : f32
    %137 = vector.broadcast %cst_29 : f32 to vector<2x64xf32>
    %138 = arith.addf %137, %136 : vector<2x64xf32>
    %139 = arith.divf %137, %138 : vector<2x64xf32>
    %140 = vector.extract_strided_slice %139 {offsets = [0, 0], sizes = [2, 32], strides = [1, 1]} : vector<2x64xf32> to vector<2x32xf32>
    %141 = vector.extract_strided_slice %139 {offsets = [0, 32], sizes = [2, 32], strides = [1, 1]} : vector<2x64xf32> to vector<2x32xf32>
    %142 = vector.extract_strided_slice %131 {offsets = [0, 64], sizes = [2, 32], strides = [1, 1]} : vector<2x96xf32> to vector<2x32xf32>
    %143 = vector.extract_strided_slice %128 {offsets = [0, 64], sizes = [2, 32], strides = [1, 1]} : vector<2x96xf32> to vector<2x32xf32>
    %144 = arith.mulf %140, %143 : vector<2x32xf32>
    %145 = arith.addf %142, %144 : vector<2x32xf32>
    %146 = math.tanh %145 : vector<2x32xf32>
    %cst_30 = arith.constant 1.000000e+00 : f32
    %147 = vector.broadcast %cst_30 : f32 to vector<2x32xf32>
    %148 = arith.subf %147, %141 : vector<2x32xf32>
    %149 = arith.mulf %148, %146 : vector<2x32xf32>
    %150 = arith.mulf %141, %121 : vector<2x32xf32>
    %151 = arith.addf %149, %150 : vector<2x32xf32>
    %152 = vector.extract_strided_slice %151 {offsets = [0, 0], sizes = [2, 16], strides = [1, 1]} : vector<2x32xf32> to vector<2x16xf32>
    %c6 = arith.constant 6 : index
    %c0_31 = arith.constant 0 : index
    %153 = vector.load %arg10[%c6, %c0_31] : memref<16x32xf32, #tpu.memory_space<vmem>>, vector<2x16xf32>
    tpu.vector_store %arg10[%c6, %c0_31], %152 {strides = array<i32>} : memref<16x32xf32, #tpu.memory_space<vmem>>, vector<2x16xf32>,
    %154 = vector.extract_strided_slice %151 {offsets = [0, 16], sizes = [2, 16], strides = [1, 1]} : vector<2x32xf32> to vector<2x16xf32>
    %c8 = arith.constant 8 : index
    %c16_32 = arith.constant 16 : index
    %155 = vector.load %arg10[%c8, %c16_32] : memref<16x32xf32, #tpu.memory_space<vmem>>, vector<2x16xf32>
    tpu.vector_store %arg10[%c8, %c16_32], %154 {strides = array<i32>} : memref<16x32xf32, #tpu.memory_space<vmem>>, vector<2x16xf32>,
    %cst_33 = arith.constant dense<0.000000e+00> : vector<2x96xf32>
    %156 = tpu.matmul %151, %33, %cst_33 {dimension_numbers = #tpu.dot_dimension_numbers<[1], [0], [0], [1], [0, 0, 1, 1], [], []>} : vector<2x32xf32>, vector<32x96xf32>, vector<2x96xf32> -> vector<2x96xf32>
    %157 = vector.broadcast %34 : vector<1x96xf32> to vector<2x96xf32>
    %158 = arith.addf %156, %157 : vector<2x96xf32>
    %159 = vector.shape_cast %32 : vector<1x96xi1> to vector<1x96xi1>
    %160 = vector.broadcast %159 : vector<1x96xi1> to vector<2x96xi1>
    %161 = arith.select %160, %10, %9 : vector<2x96xi1>, vector<2x96xf32>
    %162 = vector.extract_strided_slice %161 {offsets = [0, 0], sizes = [2, 64], strides = [1, 1]} : vector<2x96xf32> to vector<2x64xf32>
    %163 = vector.extract_strided_slice %158 {offsets = [0, 0], sizes = [2, 64], strides = [1, 1]} : vector<2x96xf32> to vector<2x64xf32>
    %164 = arith.addf %162, %163 : vector<2x64xf32>
    %165 = arith.negf %164 : vector<2x64xf32>
    %166 = math.exp %165 : vector<2x64xf32>
    %cst_34 = arith.constant 1.000000e+00 : f32
    %167 = vector.broadcast %cst_34 : f32 to vector<2x64xf32>
    %168 = arith.addf %167, %166 : vector<2x64xf32>
    %169 = arith.divf %167, %168 : vector<2x64xf32>
    %170 = vector.extract_strided_slice %169 {offsets = [0, 0], sizes = [2, 32], strides = [1, 1]} : vector<2x64xf32> to vector<2x32xf32>
    %171 = vector.extract_strided_slice %169 {offsets = [0, 32], sizes = [2, 32], strides = [1, 1]} : vector<2x64xf32> to vector<2x32xf32>
    %172 = vector.extract_strided_slice %161 {offsets = [0, 64], sizes = [2, 32], strides = [1, 1]} : vector<2x96xf32> to vector<2x32xf32>
    %173 = vector.extract_strided_slice %158 {offsets = [0, 64], sizes = [2, 32], strides = [1, 1]} : vector<2x96xf32> to vector<2x32xf32>
    %174 = arith.mulf %170, %173 : vector<2x32xf32>
    %175 = arith.addf %172, %174 : vector<2x32xf32>
    %176 = math.tanh %175 : vector<2x32xf32>
    %cst_35 = arith.constant 1.000000e+00 : f32
    %177 = vector.broadcast %cst_35 : f32 to vector<2x32xf32>
    %178 = arith.subf %177, %171 : vector<2x32xf32>
    %179 = arith.mulf %178, %176 : vector<2x32xf32>
    %180 = arith.mulf %171, %151 : vector<2x32xf32>
    %181 = arith.addf %179, %180 : vector<2x32xf32>
    %182 = vector.extract_strided_slice %181 {offsets = [0, 0], sizes = [2, 16], strides = [1, 1]} : vector<2x32xf32> to vector<2x16xf32>
    %c8_36 = arith.constant 8 : index
    %c0_37 = arith.constant 0 : index
    %183 = vector.load %arg10[%c8_36, %c0_37] : memref<16x32xf32, #tpu.memory_space<vmem>>, vector<2x16xf32>
    tpu.vector_store %arg10[%c8_36, %c0_37], %182 {strides = array<i32>} : memref<16x32xf32, #tpu.memory_space<vmem>>, vector<2x16xf32>,
    %184 = vector.extract_strided_slice %181 {offsets = [0, 16], sizes = [2, 16], strides = [1, 1]} : vector<2x32xf32> to vector<2x16xf32>
    %c6_38 = arith.constant 6 : index
    %c16_39 = arith.constant 16 : index
    %185 = vector.load %arg10[%c6_38, %c16_39] : memref<16x32xf32, #tpu.memory_space<vmem>>, vector<2x16xf32>
    tpu.vector_store %arg10[%c6_38, %c16_39], %184 {strides = array<i32>} : memref<16x32xf32, #tpu.memory_space<vmem>>, vector<2x16xf32>,
    %cst_40 = arith.constant dense<0.000000e+00> : vector<2x96xf32>
    %186 = tpu.matmul %181, %33, %cst_40 {dimension_numbers = #tpu.dot_dimension_numbers<[1], [0], [0], [1], [0, 0, 1, 1], [], []>} : vector<2x32xf32>, vector<32x96xf32>, vector<2x96xf32> -> vector<2x96xf32>
    %187 = vector.broadcast %34 : vector<1x96xf32> to vector<2x96xf32>
    %188 = arith.addf %186, %187 : vector<2x96xf32>
    %189 = vector.shape_cast %32 : vector<1x96xi1> to vector<1x96xi1>
    %190 = vector.broadcast %189 : vector<1x96xi1> to vector<2x96xi1>
    %191 = arith.select %190, %11, %8 : vector<2x96xi1>, vector<2x96xf32>
    %192 = vector.extract_strided_slice %191 {offsets = [0, 0], sizes = [2, 64], strides = [1, 1]} : vector<2x96xf32> to vector<2x64xf32>
    %193 = vector.extract_strided_slice %188 {offsets = [0, 0], sizes = [2, 64], strides = [1, 1]} : vector<2x96xf32> to vector<2x64xf32>
    %194 = arith.addf %192, %193 : vector<2x64xf32>
    %195 = arith.negf %194 : vector<2x64xf32>
    %196 = math.exp %195 : vector<2x64xf32>
    %cst_41 = arith.constant 1.000000e+00 : f32
    %197 = vector.broadcast %cst_41 : f32 to vector<2x64xf32>
    %198 = arith.addf %197, %196 : vector<2x64xf32>
    %199 = arith.divf %197, %198 : vector<2x64xf32>
    %200 = vector.extract_strided_slice %199 {offsets = [0, 0], sizes = [2, 32], strides = [1, 1]} : vector<2x64xf32> to vector<2x32xf32>
    %201 = vector.extract_strided_slice %199 {offsets = [0, 32], sizes = [2, 32], strides = [1, 1]} : vector<2x64xf32> to vector<2x32xf32>
    %202 = vector.extract_strided_slice %191 {offsets = [0, 64], sizes = [2, 32], strides = [1, 1]} : vector<2x96xf32> to vector<2x32xf32>
    %203 = vector.extract_strided_slice %188 {offsets = [0, 64], sizes = [2, 32], strides = [1, 1]} : vector<2x96xf32> to vector<2x32xf32>
    %204 = arith.mulf %200, %203 : vector<2x32xf32>
    %205 = arith.addf %202, %204 : vector<2x32xf32>
    %206 = math.tanh %205 : vector<2x32xf32>
    %cst_42 = arith.constant 1.000000e+00 : f32
    %207 = vector.broadcast %cst_42 : f32 to vector<2x32xf32>
    %208 = arith.subf %207, %201 : vector<2x32xf32>
    %209 = arith.mulf %208, %206 : vector<2x32xf32>
    %210 = arith.mulf %201, %181 : vector<2x32xf32>
    %211 = arith.addf %209, %210 : vector<2x32xf32>
    %212 = vector.extract_strided_slice %211 {offsets = [0, 0], sizes = [2, 16], strides = [1, 1]} : vector<2x32xf32> to vector<2x16xf32>
    %c10_43 = arith.constant 10 : index
    %c0_44 = arith.constant 0 : index
    %213 = vector.load %arg10[%c10_43, %c0_44] : memref<16x32xf32, #tpu.memory_space<vmem>>, vector<2x16xf32>
    tpu.vector_store %arg10[%c10_43, %c0_44], %212 {strides = array<i32>} : memref<16x32xf32, #tpu.memory_space<vmem>>, vector<2x16xf32>,
    %214 = vector.extract_strided_slice %211 {offsets = [0, 16], sizes = [2, 16], strides = [1, 1]} : vector<2x32xf32> to vector<2x16xf32>
    %c4_45 = arith.constant 4 : index
    %c16_46 = arith.constant 16 : index
    %215 = vector.load %arg10[%c4_45, %c16_46] : memref<16x32xf32, #tpu.memory_space<vmem>>, vector<2x16xf32>
    tpu.vector_store %arg10[%c4_45, %c16_46], %214 {strides = array<i32>} : memref<16x32xf32, #tpu.memory_space<vmem>>, vector<2x16xf32>,
    %cst_47 = arith.constant dense<0.000000e+00> : vector<2x96xf32>
    %216 = tpu.matmul %211, %33, %cst_47 {dimension_numbers = #tpu.dot_dimension_numbers<[1], [0], [0], [1], [0, 0, 1, 1], [], []>} : vector<2x32xf32>, vector<32x96xf32>, vector<2x96xf32> -> vector<2x96xf32>
    %217 = vector.broadcast %34 : vector<1x96xf32> to vector<2x96xf32>
    %218 = arith.addf %216, %217 : vector<2x96xf32>
    %219 = vector.shape_cast %32 : vector<1x96xi1> to vector<1x96xi1>
    %220 = vector.broadcast %219 : vector<1x96xi1> to vector<2x96xi1>
    %221 = arith.select %220, %12, %7 : vector<2x96xi1>, vector<2x96xf32>
    %222 = vector.extract_strided_slice %221 {offsets = [0, 0], sizes = [2, 64], strides = [1, 1]} : vector<2x96xf32> to vector<2x64xf32>
    %223 = vector.extract_strided_slice %218 {offsets = [0, 0], sizes = [2, 64], strides = [1, 1]} : vector<2x96xf32> to vector<2x64xf32>
    %224 = arith.addf %222, %223 : vector<2x64xf32>
    %225 = arith.negf %224 : vector<2x64xf32>
    %226 = math.exp %225 : vector<2x64xf32>
    %cst_48 = arith.constant 1.000000e+00 : f32
    %227 = vector.broadcast %cst_48 : f32 to vector<2x64xf32>
    %228 = arith.addf %227, %226 : vector<2x64xf32>
    %229 = arith.divf %227, %228 : vector<2x64xf32>
    %230 = vector.extract_strided_slice %229 {offsets = [0, 0], sizes = [2, 32], strides = [1, 1]} : vector<2x64xf32> to vector<2x32xf32>
    %231 = vector.extract_strided_slice %229 {offsets = [0, 32], sizes = [2, 32], strides = [1, 1]} : vector<2x64xf32> to vector<2x32xf32>
    %232 = vector.extract_strided_slice %221 {offsets = [0, 64], sizes = [2, 32], strides = [1, 1]} : vector<2x96xf32> to vector<2x32xf32>
    %233 = vector.extract_strided_slice %218 {offsets = [0, 64], sizes = [2, 32], strides = [1, 1]} : vector<2x96xf32> to vector<2x32xf32>
    %234 = arith.mulf %230, %233 : vector<2x32xf32>
    %235 = arith.addf %232, %234 : vector<2x32xf32>
    %236 = math.tanh %235 : vector<2x32xf32>
    %cst_49 = arith.constant 1.000000e+00 : f32
    %237 = vector.broadcast %cst_49 : f32 to vector<2x32xf32>
    %238 = arith.subf %237, %231 : vector<2x32xf32>
    %239 = arith.mulf %238, %236 : vector<2x32xf32>
    %240 = arith.mulf %231, %211 : vector<2x32xf32>
    %241 = arith.addf %239, %240 : vector<2x32xf32>
    %242 = vector.extract_strided_slice %241 {offsets = [0, 0], sizes = [2, 16], strides = [1, 1]} : vector<2x32xf32> to vector<2x16xf32>
    %c12_50 = arith.constant 12 : index
    %c0_51 = arith.constant 0 : index
    %243 = vector.load %arg10[%c12_50, %c0_51] : memref<16x32xf32, #tpu.memory_space<vmem>>, vector<2x16xf32>
    tpu.vector_store %arg10[%c12_50, %c0_51], %242 {strides = array<i32>} : memref<16x32xf32, #tpu.memory_space<vmem>>, vector<2x16xf32>,
    %244 = vector.extract_strided_slice %241 {offsets = [0, 16], sizes = [2, 16], strides = [1, 1]} : vector<2x32xf32> to vector<2x16xf32>
    %c2_52 = arith.constant 2 : index
    %c16_53 = arith.constant 16 : index
    %245 = vector.load %arg10[%c2_52, %c16_53] : memref<16x32xf32, #tpu.memory_space<vmem>>, vector<2x16xf32>
    tpu.vector_store %arg10[%c2_52, %c16_53], %244 {strides = array<i32>} : memref<16x32xf32, #tpu.memory_space<vmem>>, vector<2x16xf32>,
    %cst_54 = arith.constant dense<0.000000e+00> : vector<2x96xf32>
    %246 = tpu.matmul %241, %33, %cst_54 {dimension_numbers = #tpu.dot_dimension_numbers<[1], [0], [0], [1], [0, 0, 1, 1], [], []>} : vector<2x32xf32>, vector<32x96xf32>, vector<2x96xf32> -> vector<2x96xf32>
    %247 = vector.broadcast %34 : vector<1x96xf32> to vector<2x96xf32>
    %248 = arith.addf %246, %247 : vector<2x96xf32>
    %249 = vector.shape_cast %32 : vector<1x96xi1> to vector<1x96xi1>
    %250 = vector.broadcast %249 : vector<1x96xi1> to vector<2x96xi1>
    %251 = arith.select %250, %13, %6 : vector<2x96xi1>, vector<2x96xf32>
    %252 = vector.extract_strided_slice %251 {offsets = [0, 0], sizes = [2, 64], strides = [1, 1]} : vector<2x96xf32> to vector<2x64xf32>
    %253 = vector.extract_strided_slice %248 {offsets = [0, 0], sizes = [2, 64], strides = [1, 1]} : vector<2x96xf32> to vector<2x64xf32>
    %254 = arith.addf %252, %253 : vector<2x64xf32>
    %255 = arith.negf %254 : vector<2x64xf32>
    %256 = math.exp %255 : vector<2x64xf32>
    %cst_55 = arith.constant 1.000000e+00 : f32
    %257 = vector.broadcast %cst_55 : f32 to vector<2x64xf32>
    %258 = arith.addf %257, %256 : vector<2x64xf32>
    %259 = arith.divf %257, %258 : vector<2x64xf32>
    %260 = vector.extract_strided_slice %259 {offsets = [0, 0], sizes = [2, 32], strides = [1, 1]} : vector<2x64xf32> to vector<2x32xf32>
    %261 = vector.extract_strided_slice %259 {offsets = [0, 32], sizes = [2, 32], strides = [1, 1]} : vector<2x64xf32> to vector<2x32xf32>
    %262 = vector.extract_strided_slice %251 {offsets = [0, 64], sizes = [2, 32], strides = [1, 1]} : vector<2x96xf32> to vector<2x32xf32>
    %263 = vector.extract_strided_slice %248 {offsets = [0, 64], sizes = [2, 32], strides = [1, 1]} : vector<2x96xf32> to vector<2x32xf32>
    %264 = arith.mulf %260, %263 : vector<2x32xf32>
    %265 = arith.addf %262, %264 : vector<2x32xf32>
    %266 = math.tanh %265 : vector<2x32xf32>
    %cst_56 = arith.constant 1.000000e+00 : f32
    %267 = vector.broadcast %cst_56 : f32 to vector<2x32xf32>
    %268 = arith.subf %267, %261 : vector<2x32xf32>
    %269 = arith.mulf %268, %266 : vector<2x32xf32>
    %270 = arith.mulf %261, %241 : vector<2x32xf32>
    %271 = arith.addf %269, %270 : vector<2x32xf32>
    %272 = vector.extract_strided_slice %271 {offsets = [0, 0], sizes = [2, 16], strides = [1, 1]} : vector<2x32xf32> to vector<2x16xf32>
    %c14_57 = arith.constant 14 : index
    %c0_58 = arith.constant 0 : index
    %273 = vector.load %arg10[%c14_57, %c0_58] : memref<16x32xf32, #tpu.memory_space<vmem>>, vector<2x16xf32>
    tpu.vector_store %arg10[%c14_57, %c0_58], %272 {strides = array<i32>} : memref<16x32xf32, #tpu.memory_space<vmem>>, vector<2x16xf32>,
    %274 = vector.extract_strided_slice %271 {offsets = [0, 16], sizes = [2, 16], strides = [1, 1]} : vector<2x32xf32> to vector<2x16xf32>
    %c0_59 = arith.constant 0 : index
    %c16_60 = arith.constant 16 : index
    %275 = vector.load %arg10[%c0_59, %c16_60] : memref<16x32xf32, #tpu.memory_space<vmem>>, vector<2x16xf32>
    tpu.vector_store %arg10[%c0_59, %c16_60], %274 {strides = array<i32>} : memref<16x32xf32, #tpu.memory_space<vmem>>, vector<2x16xf32>,
    %276 = vector.extract_strided_slice %271 {offsets = [0, 0], sizes = [2, 16], strides = [1, 1]} : vector<2x32xf32> to vector<2x16xf32>
    %c0_61 = arith.constant 0 : index
    %c0_62 = arith.constant 0 : index
    %c0_63 = arith.constant 0 : index
    %277 = vector.load %arg9[%c0_61, %c0_62, %c0_63] : memref<2x2x16xf32, #tpu.memory_space<vmem>>, vector<1x2x16xf32>
    %278 = vector.shape_cast %277 : vector<1x2x16xf32> to vector<2x16xf32>
    %279 = vector.shape_cast %276 : vector<2x16xf32> to vector<1x2x16xf32>
    tpu.vector_store %arg9[%c0_61, %c0_62, %c0_63], %279 {strides = array<i32>} : memref<2x2x16xf32, #tpu.memory_space<vmem>>, vector<1x2x16xf32>,
    %280 = vector.extract_strided_slice %271 {offsets = [0, 16], sizes = [2, 16], strides = [1, 1]} : vector<2x32xf32> to vector<2x16xf32>
    %c1 = arith.constant 1 : index
    %c0_64 = arith.constant 0 : index
    %c0_65 = arith.constant 0 : index
    %281 = vector.load %arg9[%c1, %c0_64, %c0_65] : memref<2x2x16xf32, #tpu.memory_space<vmem>>, vector<1x2x16xf32>
    %282 = vector.shape_cast %281 : vector<1x2x16xf32> to vector<2x16xf32>
    %283 = vector.shape_cast %280 : vector<2x16xf32> to vector<1x2x16xf32>
    tpu.vector_store %arg9[%c1, %c0_64, %c0_65], %283 {strides = array<i32>} : memref<2x2x16xf32, #tpu.memory_space<vmem>>, vector<1x2x16xf32>,
    %c0_66 = arith.constant 0 : index
    %c0_67 = arith.constant 0 : index
    %284 = vector.load %arg10[%c0_66, %c0_67] : memref<16x32xf32, #tpu.memory_space<vmem>>, vector<16x32xf32>
    %c0_68 = arith.constant 0 : index
    %c0_69 = arith.constant 0 : index
    %285 = vector.load %arg5[%c0_68, %c0_69] : memref<32x192xf32, #tpu.memory_space<vmem>>, vector<32x192xf32>
    %cst_70 = arith.constant dense<0.000000e+00> : vector<16x192xf32>
    %286 = tpu.matmul %284, %285, %cst_70 {dimension_numbers = #tpu.dot_dimension_numbers<[1], [0], [0], [1], [0, 0, 1, 1], [], []>} : vector<16x32xf32>, vector<32x192xf32>, vector<16x192xf32> -> vector<16x192xf32>
    %c0_71 = arith.constant 0 : index
    %c0_72 = arith.constant 0 : index
    %287 = vector.load %arg6[%c0_71, %c0_72] : memref<1x192xf32, #tpu.memory_space<vmem>>, vector<1x192xf32>
    %288 = vector.broadcast %287 : vector<1x192xf32> to vector<16x192xf32>
    %289 = arith.addf %286, %288 : vector<16x192xf32>
    %290 = math.tanh %289 : vector<16x192xf32>
    %c0_73 = arith.constant 0 : index
    %c0_74 = arith.constant 0 : index
    %291 = vector.load %arg7[%c0_73, %c0_74] : memref<1x192xf32, #tpu.memory_space<vmem>>, vector<1x192xf32>
    %292 = vector.broadcast %291 : vector<1x192xf32> to vector<16x192xf32>
    %293 = arith.mulf %290, %292 : vector<16x192xf32>
    %294 = vector.extract_strided_slice %293 {offsets = [0, 0], sizes = [16, 32], strides = [1, 1]} : vector<16x192xf32> to vector<16x32xf32>
    %cst_75 = arith.constant dense<0.000000e+00> : vector<16xf32>
    %295 = vector.multi_reduction <add>, %294, %cst_75 [1] : vector<16x32xf32> to vector<16xf32>
    %296 = vector.shape_cast %295 : vector<16xf32> to vector<16x1xf32>
    %297 = vector.extract_strided_slice %293 {offsets = [0, 32], sizes = [16, 32], strides = [1, 1]} : vector<16x192xf32> to vector<16x32xf32>
    %cst_76 = arith.constant dense<0.000000e+00> : vector<16xf32>
    %298 = vector.multi_reduction <add>, %297, %cst_76 [1] : vector<16x32xf32> to vector<16xf32>
    %299 = vector.shape_cast %298 : vector<16xf32> to vector<16x1xf32>
    %300 = vector.extract_strided_slice %293 {offsets = [0, 64], sizes = [16, 32], strides = [1, 1]} : vector<16x192xf32> to vector<16x32xf32>
    %cst_77 = arith.constant dense<0.000000e+00> : vector<16xf32>
    %301 = vector.multi_reduction <add>, %300, %cst_77 [1] : vector<16x32xf32> to vector<16xf32>
    %302 = vector.shape_cast %301 : vector<16xf32> to vector<16x1xf32>
    %303 = vector.extract_strided_slice %293 {offsets = [0, 96], sizes = [16, 32], strides = [1, 1]} : vector<16x192xf32> to vector<16x32xf32>
    %cst_78 = arith.constant dense<0.000000e+00> : vector<16xf32>
    %304 = vector.multi_reduction <add>, %303, %cst_78 [1] : vector<16x32xf32> to vector<16xf32>
    %305 = vector.shape_cast %304 : vector<16xf32> to vector<16x1xf32>
    %306 = vector.extract_strided_slice %293 {offsets = [0, 128], sizes = [16, 32], strides = [1, 1]} : vector<16x192xf32> to vector<16x32xf32>
    %cst_79 = arith.constant dense<0.000000e+00> : vector<16xf32>
    %307 = vector.multi_reduction <add>, %306, %cst_79 [1] : vector<16x32xf32> to vector<16xf32>
    %308 = vector.shape_cast %307 : vector<16xf32> to vector<16x1xf32>
    %309 = vector.extract_strided_slice %293 {offsets = [0, 160], sizes = [16, 32], strides = [1, 1]} : vector<16x192xf32> to vector<16x32xf32>
    %cst_80 = arith.constant dense<0.000000e+00> : vector<16xf32>
    %310 = vector.multi_reduction <add>, %309, %cst_80 [1] : vector<16x32xf32> to vector<16xf32>
    %311 = vector.shape_cast %310 : vector<16xf32> to vector<16x1xf32>
    %312 = tpu.concatenate %296, %299, %302, %305, %308, %311 in 1 : vector<16x1xf32>, vector<16x1xf32>, vector<16x1xf32>, vector<16x1xf32>, vector<16x1xf32>, vector<16x1xf32> -> vector<16x6xf32>
    %313 = vector.shape_cast %312 : vector<16x6xf32> to vector<8x2x6xf32>
    %cst_81 = arith.constant dense<0xFF800000> : vector<2x6xf32>
    %314 = vector.multi_reduction <maximumf>, %313, %cst_81 [0] : vector<8x2x6xf32> to vector<2x6xf32>
    %315 = vector.shape_cast %314 : vector<2x6xf32> to vector<1x2x6xf32>
    %316 = vector.broadcast %315 : vector<1x2x6xf32> to vector<8x2x6xf32>
    %317 = arith.subf %313, %316 : vector<8x2x6xf32>
    %318 = math.exp %317 : vector<8x2x6xf32>
    %cst_82 = arith.constant dense<0.000000e+00> : vector<2x6xf32>
    %319 = vector.multi_reduction <add>, %318, %cst_82 [0] : vector<8x2x6xf32> to vector<2x6xf32>
    %320 = vector.shape_cast %319 : vector<2x6xf32> to vector<1x2x6xf32>
    %321 = vector.broadcast %320 : vector<1x2x6xf32> to vector<8x2x6xf32>
    %322 = arith.divf %318, %321 : vector<8x2x6xf32>
    %cst_83 = arith.constant dense<0.000000e+00> : vector<8x2xf32>
    %323 = vector.multi_reduction <add>, %322, %cst_83 [2] : vector<8x2x6xf32> to vector<8x2xf32>
    %cst_84 = arith.constant 0.166666672 : f32
    %324 = vector.broadcast %cst_84 : f32 to vector<8x2xf32>
    %325 = arith.mulf %323, %324 : vector<8x2xf32>
    %326 = vector.shape_cast %325 : vector<8x2xf32> to vector<8x2x1xf32>
    %327 = vector.shape_cast %284 : vector<16x32xf32> to vector<8x2x32xf32>
    %328 = vector.broadcast %326 : vector<8x2x1xf32> to vector<8x2x32xf32>
    %329 = arith.mulf %328, %327 : vector<8x2x32xf32>
    %cst_85 = arith.constant dense<0.000000e+00> : vector<2x32xf32>
    %330 = vector.multi_reduction <add>, %329, %cst_85 [0] : vector<8x2x32xf32> to vector<2x32xf32>
    %c0_86 = arith.constant 0 : index
    %c0_87 = arith.constant 0 : index
    %331 = vector.load %arg8[%c0_86, %c0_87] : memref<2x32xf32, #tpu.memory_space<vmem>>, vector<2x32xf32>
    tpu.vector_store %arg8[%c0_86, %c0_87], %330 {strides = array<i32>} : memref<2x32xf32, #tpu.memory_space<vmem>>, vector<2x32xf32>,
    return
  }
}

</mosaic_0001>

<llo_original>
// kernel: sent_att_net_forward.1
$region0: #{sent_att_net_forward.1}
  #allocation0 [shape = 'u32[]', space=smem, size = 0x4, offset = 0x4, fixed_abs, tag = 'smem constant byte address 0x4 - core index']
  #allocation1 [shape = 'u32[144,128]{1,0:T(1,128)}', space=vmem, size = 0x12000, scoped, tag = 'internal scratch']
  #allocation2 [shape = 'f32[16,32]{1,0:T(8,128)}', space=vmem, size = 0x2000, scoped, tag = 'scratch operand']
  %s0 = inlined_call_operand.vmem [shape: f32[16,32], index: 0, kind: input, shape index: {}]
  %s1 = inlined_call_operand.vmem [shape: f32[32,96], index: 1, kind: input, shape index: {}]
  %s2 = inlined_call_operand.hbm [shape: f32[1,96], index: 2, kind: input, shape index: {}]
  %s3 = inlined_call_operand.hbm [shape: f32[32,96], index: 3, kind: input, shape index: {}]
  %s4 = inlined_call_operand.hbm [shape: f32[1,96], index: 4, kind: input, shape index: {}]
  %s5 = inlined_call_operand.vmem [shape: f32[32,192], index: 5, kind: input, shape index: {}]
  %s6 = inlined_call_operand.hbm [shape: f32[1,192], index: 6, kind: input, shape index: {}]
  %s7 = inlined_call_operand.vmem [shape: f32[1,192], index: 7, kind: input, shape index: {}]
  %s8 = inlined_call_operand.hbm [shape: f32[2,32], index: 8, kind: output, shape index: {0}]
  %s9 = inlined_call_operand.hbm [shape: f32[2,2,16], index: 9, kind: output, shape index: {1}]
  %10 = xla_tuple %s8, %s9
  %s11 = sld [smem:[#allocation0]]
  $region66: #{sent_att_net_forward.1} parent=0
    _
  %s13 = ssub.s32 1, %s11
  %s14 = scalar_select 0, %s13, %s11
  $region1: #{sent_att_net_forward.1} parent=0
    #allocation3 [shape = 'u8[512]{0}', space=vmem, size = 0x400, scoped, tag = 'input window, operand 2, single buffered']
    #allocation4 [shape = 's32[1]{0}', space=sflag, size = 0x4, scoped, tag = 'scoped memory for sent_att_net_forward.1']
    #allocation5 [shape = 's32[1]{0}', space=sflag, size = 0x4, scoped, tag = 'scoped memory for sent_att_net_forward.1']
    #allocation6 [shape = 'u8[16384]{0}', space=vmem, size = 0x4000, scoped, tag = 'input window, operand 3, single buffered']
    #allocation7 [shape = 's32[1]{0}', space=sflag, size = 0x4, scoped, tag = 'scoped memory for sent_att_net_forward.1']
    #allocation8 [shape = 'u8[512]{0}', space=vmem, size = 0x400, scoped, tag = 'input window, operand 4, single buffered']
    #allocation9 [shape = 'u8[1024]{0}', space=vmem, size = 0x400, scoped, tag = 'input window, operand 6, single buffered']
    #allocation10 [shape = 's32[1]{0}', space=sflag, size = 0x4, scoped, tag = 'scoped memory for sent_att_net_forward.1']
    #allocation11 [shape = 'u8[1024]{0}', space=vmem, size = 0x400, scoped, tag = 'output window, operand 0, single buffered']
    #allocation12 [shape = 'u8[2048]{0}', space=vmem, size = 0x800, scoped, tag = 'output window, operand 1, single buffered']
    #allocation13 [shape = 's32[1]{0}', space=sflag, size = 0x4, scoped, tag = 'scoped memory for sent_att_net_forward.1']
    %15 = vsyncpa [#allocation4], 0
    %16 = vsyncpa [#allocation7], 0
    %17 = vsyncpa [#allocation10], 0
    %18 = vsyncpa [#allocation5], 0
    %19 = vsyncpa [#allocation13], 0
    // Predicated region
    $region2: #{sent_att_net_forward.1} parent=1 // pred_check
      _
    $region3: #{sent_att_net_forward.1} parent=1 // pred_check_branch
      %21 = sbr.rel (0) target = $region5
    $region4: #{sent_att_net_forward.1} parent=1 // pred_region
      _
    $region5: #{sent_att_net_forward.1} parent=1 // pred_fallthru
      _
    // Predicated region
    $region6: #{sent_att_net_forward.1} parent=1 // pred_check
      _
    $region7: #{sent_att_net_forward.1} parent=1 // pred_check_branch
      %23 = sbr.rel (0) target = $region9
    $region8: #{sent_att_net_forward.1} parent=1 // pred_region
      _
    $region9: #{sent_att_net_forward.1} parent=1 // pred_fallthru
      _
    // Predicated region
    $region10: #{sent_att_net_forward.1} parent=1 // pred_check
      _
    $region11: #{sent_att_net_forward.1} parent=1 // pred_check_branch
      %25 = sbr.rel (0) target = $region13
    $region12: #{sent_att_net_forward.1} parent=1 // pred_region
      %s27 = ssub.s32 16, 16
      %28 = vsyncadd [#allocation4], %s27
      %s30 = sshll.u32 [#allocation3], 4
      %s31 = int_to_ptr.vmem [resolvable:$true] %s30
      %33 = dma.hbm_to_vmem [thread:$0]  %s2, 16, %s31, [#allocation4]
    $region13: #{sent_att_net_forward.1} parent=1 // pred_fallthru
      _
    // Predicated region
    $region14: #{sent_att_net_forward.1} parent=1 // pred_check
      _
    $region15: #{sent_att_net_forward.1} parent=1 // pred_check_branch
      %35 = sbr.rel (0) target = $region17
    $region16: #{sent_att_net_forward.1} parent=1 // pred_region
      %s37 = ssub.s32 512, 512
      %38 = vsyncadd [#allocation7], %s37
      %s39 = sshll.u32 [#allocation6], 4
      %s40 = int_to_ptr.vmem [resolvable:$true] %s39
      %45 = dma.hbm_to_vmem [thread:$0]  %s3, 512, %s40, [#allocation7], 128, 128, 8
    $region17: #{sent_att_net_forward.1} parent=1 // pred_fallthru
      _
    // Predicated region
    $region18: #{sent_att_net_forward.1} parent=1 // pred_check
      _
    $region19: #{sent_att_net_forward.1} parent=1 // pred_check_branch
      %47 = sbr.rel (0) target = $region21
    $region20: #{sent_att_net_forward.1} parent=1 // pred_region
      %s49 = ssub.s32 16, 16
      %50 = vsyncadd [#allocation7], %s49
      %s52 = sshll.u32 [#allocation8], 4
      %s53 = int_to_ptr.vmem [resolvable:$true] %s52
      %55 = dma.hbm_to_vmem [thread:$0]  %s4, 16, %s53, [#allocation7]
    $region21: #{sent_att_net_forward.1} parent=1 // pred_fallthru
      _
    // Predicated region
    $region22: #{sent_att_net_forward.1} parent=1 // pred_check
      _
    $region23: #{sent_att_net_forward.1} parent=1 // pred_check_branch
      %57 = sbr.rel (0) target = $region25
    $region24: #{sent_att_net_forward.1} parent=1 // pred_region
      _
    $region25: #{sent_att_net_forward.1} parent=1 // pred_fallthru
      _
    // Predicated region
    $region26: #{sent_att_net_forward.1} parent=1 // pred_check
      _
    $region27: #{sent_att_net_forward.1} parent=1 // pred_check_branch
      %59 = sbr.rel (0) target = $region29
    $region28: #{sent_att_net_forward.1} parent=1 // pred_region
      %s61 = ssub.s32 32, 32
      %62 = vsyncadd [#allocation10], %s61
      %s64 = sshll.u32 [#allocation9], 4
      %s65 = int_to_ptr.vmem [resolvable:$true] %s64
      %67 = dma.hbm_to_vmem [thread:$0]  %s6, 32, %s65, [#allocation10]
    $region29: #{sent_att_net_forward.1} parent=1 // pred_fallthru
      _
    // Predicated region
    $region30: #{sent_att_net_forward.1} parent=1 // pred_check
      _
    $region31: #{sent_att_net_forward.1} parent=1 // pred_check_branch
      %69 = sbr.rel (0) target = $region33
    $region32: #{sent_att_net_forward.1} parent=1 // pred_region
      _
    $region33: #{sent_att_net_forward.1} parent=1 // pred_fallthru
      _
    // Predicated region
    $region34: #{sent_att_net_forward.1} parent=1 // pred_check
      _
    $region35: #{sent_att_net_forward.1} parent=1 // pred_check_branch
      %71 = sbr.rel (0) target = $region37
    $region36: #{sent_att_net_forward.1} parent=1 // pred_region
      %72 = dma.done [#allocation4], 16
    $region37: #{sent_att_net_forward.1} parent=1 // pred_fallthru
      _
    // Predicated region
    $region38: #{sent_att_net_forward.1} parent=1 // pred_check
      _
    $region39: #{sent_att_net_forward.1} parent=1 // pred_check_branch
      %74 = sbr.rel (0) target = $region41
    $region40: #{sent_att_net_forward.1} parent=1 // pred_region
      %75 = dma.done [#allocation7], 512
    $region41: #{sent_att_net_forward.1} parent=1 // pred_fallthru
      _
    // Predicated region
    $region42: #{sent_att_net_forward.1} parent=1 // pred_check
      _
    $region43: #{sent_att_net_forward.1} parent=1 // pred_check_branch
      %77 = sbr.rel (0) target = $region45
    $region44: #{sent_att_net_forward.1} parent=1 // pred_region
      %78 = dma.done [#allocation7], 16
    $region45: #{sent_att_net_forward.1} parent=1 // pred_fallthru
      _
    // Predicated region
    $region46: #{sent_att_net_forward.1} parent=1 // pred_check
      _
    $region47: #{sent_att_net_forward.1} parent=1 // pred_check_branch
      %80 = sbr.rel (0) target = $region49
    $region48: #{sent_att_net_forward.1} parent=1 // pred_region
      %81 = dma.done [#allocation10], 32
    $region49: #{sent_att_net_forward.1} parent=1 // pred_fallthru
      _
    %v82 = vld [vmem:[%s0] sm:$0xff]
    %v83 = vld [vmem:[%s0 + $0x8] sm:$0xff]
    %v84 = vld [vmem:[%s1] sm:$0xff]
    %v85 = vld [vmem:[%s1 + $0x8] sm:$0xff]
    %v86 = vld [vmem:[%s1 + $0x10] sm:$0xff]
    %v87 = vld [vmem:[%s1 + $0x18] sm:$0xff]
    %v88 = vld [vmem:[#allocation3] sm:$0x1]
    %v90 = vlaneseq
    %v91 = vshrl.u32 %v90, 7
    %v92 = vsub.s32 0, %v91
    %v93 = vrot.slane %v88, %v92
    %vm95 = vcmask 261120
    %v97 = vsel %vm95, %v82, 0
    %v100 = vsel %vm95, %v83, 0
    %102 = vmatprep.subr.mxu0 0.0
    %103 = vmatpush1.msra.mxu0 %v84
    %104 = vmatprep.subr.mxu0 0.0
    %105 = vmatpush1.msra.mxu0 %v85
    %106 = vmatprep.subr.mxu0 0.0
    %107 = vmatpush1.msra.mxu0 %v86
    %108 = vmatprep.subr.mxu0 0.0
    %109 = vmatpush1.msra.mxu0 %v87
    %110 = vmatprep.subr.mxu0 0.0
    %111 = vmatpush1.msra.mxu0 0.0
    %112 = vmatprep.subr.mxu0 0.0
    %113 = vmatpush1.msra.mxu0 0.0
    %114 = vmatprep.subr.mxu0 0.0
    %115 = vmatpush1.msra.mxu0 0.0
    %116 = vmatprep.subr.mxu0 0.0
    %117 = vmatpush1.msra.mxu0 0.0
    %118 = vmatprep.subr.mxu0 0.0
    %119 = vmatpush1.msra.mxu0 0.0
    %120 = vmatprep.subr.mxu0 0.0
    %121 = vmatpush1.msra.mxu0 0.0
    %122 = vmatprep.subr.mxu0 0.0
    %123 = vmatpush1.msra.mxu0 0.0
    %124 = vmatprep.subr.mxu0 0.0
    %125 = vmatpush1.msra.mxu0 0.0
    %126 = vmatprep.subr.mxu0 0.0
    %127 = vmatpush1.msra.mxu0 0.0
    %128 = vmatprep.subr.mxu0 0.0
    %129 = vmatpush1.msra.mxu0 0.0
    %130 = vmatprep.subr.mxu0 0.0
    %131 = vmatpush1.msra.mxu0 0.0
    %132 = vmatprep.subr.mxu0 0.0
    %133 = vmatpush1.msra.mxu0 0.0
    %134 = vmatprep.subr.mxu0 0.0
    %135 = vmatpush1.msra.mxu0 0.0
    %136 = vmatprep.subr.mxu0 0.0
    %137 = vmatpush1.msra.mxu0 0.0
    %138 = vmatprep.subr.mxu0 0.0
    %139 = vmatpush1.msra.mxu0 0.0
    %140 = vmatprep.subr.mxu0 0.0
    %141 = vmatpush1.msra.mxu0 0.0
    %142 = vmatprep.subr.mxu0 0.0
    %143 = vmatpush1.msra.mxu0 0.0
    %144 = vmatprep.subr.mxu0 0.0
    %145 = vmatpush1.msra.mxu0 0.0
    %146 = vmatprep.subr.mxu0 0.0
    %147 = vmatpush1.msra.mxu0 0.0
    %148 = vmatprep.subr.mxu0 0.0
    %149 = vmatpush1.msra.mxu0 0.0
    %150 = vmatprep.subr.mxu0 0.0
    %151 = vmatpush1.msra.mxu0 0.0
    %152 = vmatprep.subr.mxu0 0.0
    %153 = vmatpush1.msra.mxu0 0.0
    %154 = vmatprep.subr.mxu0 0.0
    %155 = vmatpush1.msra.mxu0 0.0
    %156 = vmatprep.subr.mxu0 0.0
    %157 = vmatpush1.msra.mxu0 0.0
    %158 = vmatprep.subr.mxu0 0.0
    %159 = vmatpush1.msra.mxu0 0.0
    %160 = vmatprep.subr.mxu0 0.0
    %161 = vmatpush1.msra.mxu0 0.0
    %162 = vmatprep.subr.mxu0 0.0
    %163 = vmatpush1.msra.mxu0 0.0
    %164 = vmatprep.subr.mxu0 0.0
    %165 = vmatpush1.msra.mxu0 0.0
    %166 = vmatprep.mubr.f32.mxu0 0.0
    %167 = vmatmul.mubr.f32.gmra.mrb[0].mxu0 %v97
    %v168 = vpop.f32.mrb[0].mxu0
    %v169 = vadd.f32 %v93, %v168
    %v170 = vpop.f32.mrb[0].mxu0
    %171 = vmatprep.mubr.f32.mxu0 0.0
    %172 = vmatmul.mubr.f32.gmra.mrb[0].mxu0 %v100
    %v173 = vpop.f32.mrb[0].mxu0
    %v174 = vadd.f32 %v93, %v173
    %v175 = vpop.f32.mrb[0].mxu0
    %176 = vdwg.mxu0
    %v177 = vlaneseq
    %v178 = vand.u32 %v177, 127
    %vm179 = vcmp.lt.s32.totalorder %v178, 0
    %v180 = vsub.s32 0, %v178
    %v181 = vsel %vm179, %v180, %v178
    %v182 = vshrl.u32 %v181, 5
    %v183 = vand.u32 %v181, 31
    %v184 = vsub.s32 0, %v183
    %v185 = vsel %vm179, %v184, %v183
    %vm186 = vcmp.ne.s32.totalorder %v185, 0
    %vm187 = vcmp.lt.s32.totalorder %v185, 0
    %vm188 = vmand %vm187, %vm186
    %v189 = vadd.s32 %v185, 32
    %v190 = vsel %vm188, %v189, %v185
    %vm191 = vcmp.lt.s32.totalorder %v190, 16
    %v192 = vld [vmem:[#allocation6] sm:$0xff]
    %v193 = vld [vmem:[#allocation6 + $0x8] sm:$0xff]
    %v194 = vld [vmem:[#allocation6 + $0x10] sm:$0xff]
    %v195 = vld [vmem:[#allocation6 + $0x18] sm:$0xff]
    %v196 = vld [vmem:[#allocation8] sm:$0x1]
    %v198 = vlaneseq
    %v199 = vshrl.u32 %v198, 7
    %v200 = vsub.s32 0, %v199
    %v201 = vrot.slane %v196, %v200
    %v204 = vsel %vm95, 0.0, 0
    %206 = vmatprep.subr.mxu0 0.0
    %207 = vmatpush1.msra.mxu0 %v192
    %208 = vmatprep.subr.mxu0 0.0
    %209 = vmatpush1.msra.mxu0 %v193
    %210 = vmatprep.subr.mxu0 0.0
    %211 = vmatpush1.msra.mxu0 %v194
    %212 = vmatprep.subr.mxu0 0.0
    %213 = vmatpush1.msra.mxu0 %v195
    %214 = vmatprep.subr.mxu0 0.0
    %215 = vmatpush1.msra.mxu0 0.0
    %216 = vmatprep.subr.mxu0 0.0
    %217 = vmatpush1.msra.mxu0 0.0
    %218 = vmatprep.subr.mxu0 0.0
    %219 = vmatpush1.msra.mxu0 0.0
    %220 = vmatprep.subr.mxu0 0.0
    %221 = vmatpush1.msra.mxu0 0.0
    %222 = vmatprep.subr.mxu0 0.0
    %223 = vmatpush1.msra.mxu0 0.0
    %224 = vmatprep.subr.mxu0 0.0
    %225 = vmatpush1.msra.mxu0 0.0
    %226 = vmatprep.subr.mxu0 0.0
    %227 = vmatpush1.msra.mxu0 0.0
    %228 = vmatprep.subr.mxu0 0.0
    %229 = vmatpush1.msra.mxu0 0.0
    %230 = vmatprep.subr.mxu0 0.0
    %231 = vmatpush1.msra.mxu0 0.0
    %232 = vmatprep.subr.mxu0 0.0
    %233 = vmatpush1.msra.mxu0 0.0
    %234 = vmatprep.subr.mxu0 0.0
    %235 = vmatpush1.msra.mxu0 0.0
    %236 = vmatprep.subr.mxu0 0.0
    %237 = vmatpush1.msra.mxu0 0.0
    %238 = vmatprep.subr.mxu0 0.0
    %239 = vmatpush1.msra.mxu0 0.0
    %240 = vmatprep.subr.mxu0 0.0
    %241 = vmatpush1.msra.mxu0 0.0
    %242 = vmatprep.subr.mxu0 0.0
    %243 = vmatpush1.msra.mxu0 0.0
    %244 = vmatprep.subr.mxu0 0.0
    %245 = vmatpush1.msra.mxu0 0.0
    %246 = vmatprep.subr.mxu0 0.0
    %247 = vmatpush1.msra.mxu0 0.0
    %248 = vmatprep.subr.mxu0 0.0
    %249 = vmatpush1.msra.mxu0 0.0
    %250 = vmatprep.subr.mxu0 0.0
    %251 = vmatpush1.msra.mxu0 0.0
    %252 = vmatprep.subr.mxu0 0.0
    %253 = vmatpush1.msra.mxu0 0.0
    %254 = vmatprep.subr.mxu0 0.0
    %255 = vmatpush1.msra.mxu0 0.0
    %256 = vmatprep.subr.mxu0 0.0
    %257 = vmatpush1.msra.mxu0 0.0
    %258 = vmatprep.subr.mxu0 0.0
    %259 = vmatpush1.msra.mxu0 0.0
    %260 = vmatprep.subr.mxu0 0.0
    %261 = vmatpush1.msra.mxu0 0.0
    %262 = vmatprep.subr.mxu0 0.0
    %263 = vmatpush1.msra.mxu0 0.0
    %264 = vmatprep.subr.mxu0 0.0
    %265 = vmatpush1.msra.mxu0 0.0
    %266 = vmatprep.subr.mxu0 0.0
    %267 = vmatpush1.msra.mxu0 0.0
    %268 = vmatprep.subr.mxu0 0.0
    %269 = vmatpush1.msra.mxu0 0.0
    %270 = vmatprep.mubr.f32.mxu0 0.0
    %271 = vmatmul.mubr.f32.gmra.mrb[0].mxu0 %v204
    %v272 = vpop.f32.mrb[0].mxu0
    %v273 = vadd.f32 %v201, %v272
    %v274 = vpop.f32.mrb[0].mxu0
    %275 = vdwg.mxu0
    %v276 = vsel %vm191, 1, 0
    %vm277 = vcmp.eq.s32.totalorder %v276, 1
    %v279 = vrot.slane %v174, 6
    %v281 = vsel %vm277, %v169, %v279
    %v282 = vadd.f32 %v281, %v273
    %v283 = vxor.u32 %v282, 2147483648
    %v284 = vmul.f32 %v283, 1.442695
    %v285 = vpow.pop %v284
    %v286 = vadd.f32 %v285, 1.0
    %v287 = vrcp.pop %v286
    %v288 = vmul.f32 1.0, %v287
    %290 = vrot.lane.b32.xlu0 %v273, 64
    %v291 = vpop.permute.xlu0 %290
    %v293 = vmul.f32 %v288, %v291
    %295 = vrot.lane.b32.xlu0 %v293, 64
    %v296 = vpop.permute.xlu0 %295
    %v298 = vadd.f32 %v281, %v296
    %v299 = vtanh.pop %v298
    %v300 = vsub.f32 1.0, %v288
    %302 = vrot.lane.b32.xlu0 %v299, 96
    %v303 = vpop.permute.xlu0 %302
    %v305 = vmul.f32 %v300, %v303
    %v306 = vmul.f32 %v288, 0.0
    %v307 = vadd.f32 %v305, %v306
    %309 = vrot.lane.b32.xlu0 %v307, 96
    %v310 = vpop.permute.xlu0 %309
    %vm312 = vcmask 123904
    %313 = vst.msk [vmem:[#allocation2] sm:$0x3] %vm312, %v310
    %vm314 = vcmask 255104
    %315 = vst.msk [vmem:[#allocation2 + $0xe] sm:$0x3] %vm314, %v310
    %v316 = vsel %vm95, %v310, 0
    %318 = vmatprep.subr.mxu0 0.0
    %319 = vmatpush1.msra.mxu0 %v192
    %320 = vmatprep.subr.mxu0 0.0
    %321 = vmatpush1.msra.mxu0 %v193
    %322 = vmatprep.subr.mxu0 0.0
    %323 = vmatpush1.msra.mxu0 %v194
    %324 = vmatprep.subr.mxu0 0.0
    %325 = vmatpush1.msra.mxu0 %v195
    %326 = vmatprep.subr.mxu0 0.0
    %327 = vmatpush1.msra.mxu0 0.0
    %328 = vmatprep.subr.mxu0 0.0
    %329 = vmatpush1.msra.mxu0 0.0
    %330 = vmatprep.subr.mxu0 0.0
    %331 = vmatpush1.msra.mxu0 0.0
    %332 = vmatprep.subr.mxu0 0.0
    %333 = vmatpush1.msra.mxu0 0.0
    %334 = vmatprep.subr.mxu0 0.0
    %335 = vmatpush1.msra.mxu0 0.0
    %336 = vmatprep.subr.mxu0 0.0
    %337 = vmatpush1.msra.mxu0 0.0
    %338 = vmatprep.subr.mxu0 0.0
    %339 = vmatpush1.msra.mxu0 0.0
    %340 = vmatprep.subr.mxu0 0.0
    %341 = vmatpush1.msra.mxu0 0.0
    %342 = vmatprep.subr.mxu0 0.0
    %343 = vmatpush1.msra.mxu0 0.0
    %344 = vmatprep.subr.mxu0 0.0
    %345 = vmatpush1.msra.mxu0 0.0
    %346 = vmatprep.subr.mxu0 0.0
    %347 = vmatpush1.msra.mxu0 0.0
    %348 = vmatprep.subr.mxu0 0.0
    %349 = vmatpush1.msra.mxu0 0.0
    %350 = vmatprep.subr.mxu0 0.0
    %351 = vmatpush1.msra.mxu0 0.0
    %352 = vmatprep.subr.mxu0 0.0
    %353 = vmatpush1.msra.mxu0 0.0
    %354 = vmatprep.subr.mxu0 0.0
    %355 = vmatpush1.msra.mxu0 0.0
    %356 = vmatprep.subr.mxu0 0.0
    %357 = vmatpush1.msra.mxu0 0.0
    %358 = vmatprep.subr.mxu0 0.0
    %359 = vmatpush1.msra.mxu0 0.0
    %360 = vmatprep.subr.mxu0 0.0
    %361 = vmatpush1.msra.mxu0 0.0
    %362 = vmatprep.subr.mxu0 0.0
    %363 = vmatpush1.msra.mxu0 0.0
    %364 = vmatprep.subr.mxu0 0.0
    %365 = vmatpush1.msra.mxu0 0.0
    %366 = vmatprep.subr.mxu0 0.0
    %367 = vmatpush1.msra.mxu0 0.0
    %368 = vmatprep.subr.mxu0 0.0
    %369 = vmatpush1.msra.mxu0 0.0
    %370 = vmatprep.subr.mxu0 0.0
    %371 = vmatpush1.msra.mxu0 0.0
    %372 = vmatprep.subr.mxu0 0.0
    %373 = vmatpush1.msra.mxu0 0.0
    %374 = vmatprep.subr.mxu0 0.0
    %375 = vmatpush1.msra.mxu0 0.0
    %376 = vmatprep.subr.mxu0 0.0
    %377 = vmatpush1.msra.mxu0 0.0
    %378 = vmatprep.subr.mxu0 0.0
    %379 = vmatpush1.msra.mxu0 0.0
    %380 = vmatprep.subr.mxu0 0.0
    %381 = vmatpush1.msra.mxu0 0.0
    %382 = vmatprep.mubr.f32.mxu0 0.0
    %383 = vmatmul.mubr.f32.gmra.mrb[0].mxu0 %v316
    %v384 = vpop.f32.mrb[0].mxu0
    %v385 = vadd.f32 %v201, %v384
    %v386 = vpop.f32.mrb[0].mxu0
    %387 = vdwg.mxu0
    %v388 = vrot.slane %v174, 2
    %v390 = vsel %vm277, %v169, %v388
    %v392 = vrot.slane %v385, 6
    %v394 = vadd.f32 %v390, %v392
    %v395 = vxor.u32 %v394, 2147483648
    %v396 = vmul.f32 %v395, 1.442695
    %v397 = vpow.pop %v396
    %v398 = vadd.f32 %v397, 1.0
    %v399 = vrcp.pop %v398
    %v400 = vmul.f32 1.0, %v399
    %401 = vrot.lane.b32.xlu0 %v392, 64
    %v402 = vpop.permute.xlu0 %401
    %v404 = vmul.f32 %v400, %v402
    %406 = vrot.lane.b32.xlu0 %v404, 64
    %v407 = vpop.permute.xlu0 %406
    %v409 = vadd.f32 %v390, %v407
    %v410 = vtanh.pop %v409
    %v411 = vsub.f32 1.0, %v400
    %413 = vrot.lane.b32.xlu0 %v410, 96
    %v414 = vpop.permute.xlu0 %413
    %v416 = vmul.f32 %v411, %v414
    %v417 = vrot.slane %v307, 6
    %v419 = vmul.f32 %v400, %v417
    %v420 = vadd.f32 %v416, %v419
    %422 = vrot.lane.b32.xlu0 %v420, 96
    %v423 = vpop.permute.xlu0 %422
    %vm425 = vcmask 125954
    %426 = vst.msk [vmem:[#allocation2] sm:$0xc] %vm425, %v423
    %vm427 = vcmask 257154
    %428 = vst.msk [vmem:[#allocation2 + $0xa] sm:$0xc] %vm427, %v423
    %v429 = vrot.slane %v420, 2
    %430 = vrot.lane.b32.xlu0 %v429, 96
    %v431 = vpop.permute.xlu0 %430
    %v432 = vsel %vm95, %v431, 0
    %434 = vmatprep.subr.mxu0 0.0
    %435 = vmatpush1.msra.mxu0 %v192
    %436 = vmatprep.subr.mxu0 0.0
    %437 = vmatpush1.msra.mxu0 %v193
    %438 = vmatprep.subr.mxu0 0.0
    %439 = vmatpush1.msra.mxu0 %v194
    %440 = vmatprep.subr.mxu0 0.0
    %441 = vmatpush1.msra.mxu0 %v195
    %442 = vmatprep.subr.mxu0 0.0
    %443 = vmatpush1.msra.mxu0 0.0
    %444 = vmatprep.subr.mxu0 0.0
    %445 = vmatpush1.msra.mxu0 0.0
    %446 = vmatprep.subr.mxu0 0.0
    %447 = vmatpush1.msra.mxu0 0.0
    %448 = vmatprep.subr.mxu0 0.0
    %449 = vmatpush1.msra.mxu0 0.0
    %450 = vmatprep.subr.mxu0 0.0
    %451 = vmatpush1.msra.mxu0 0.0
    %452 = vmatprep.subr.mxu0 0.0
    %453 = vmatpush1.msra.mxu0 0.0
    %454 = vmatprep.subr.mxu0 0.0
    %455 = vmatpush1.msra.mxu0 0.0
    %456 = vmatprep.subr.mxu0 0.0
    %457 = vmatpush1.msra.mxu0 0.0
    %458 = vmatprep.subr.mxu0 0.0
    %459 = vmatpush1.msra.mxu0 0.0
    %460 = vmatprep.subr.mxu0 0.0
    %461 = vmatpush1.msra.mxu0 0.0
    %462 = vmatprep.subr.mxu0 0.0
    %463 = vmatpush1.msra.mxu0 0.0
    %464 = vmatprep.subr.mxu0 0.0
    %465 = vmatpush1.msra.mxu0 0.0
    %466 = vmatprep.subr.mxu0 0.0
    %467 = vmatpush1.msra.mxu0 0.0
    %468 = vmatprep.subr.mxu0 0.0
    %469 = vmatpush1.msra.mxu0 0.0
    %470 = vmatprep.subr.mxu0 0.0
    %471 = vmatpush1.msra.mxu0 0.0
    %472 = vmatprep.subr.mxu0 0.0
    %473 = vmatpush1.msra.mxu0 0.0
    %474 = vmatprep.subr.mxu0 0.0
    %475 = vmatpush1.msra.mxu0 0.0
    %476 = vmatprep.subr.mxu0 0.0
    %477 = vmatpush1.msra.mxu0 0.0
    %478 = vmatprep.subr.mxu0 0.0
    %479 = vmatpush1.msra.mxu0 0.0
    %480 = vmatprep.subr.mxu0 0.0
    %481 = vmatpush1.msra.mxu0 0.0
    %482 = vmatprep.subr.mxu0 0.0
    %483 = vmatpush1.msra.mxu0 0.0
    %484 = vmatprep.subr.mxu0 0.0
    %485 = vmatpush1.msra.mxu0 0.0
    %486 = vmatprep.subr.mxu0 0.0
    %487 = vmatpush1.msra.mxu0 0.0
    %488 = vmatprep.subr.mxu0 0.0
    %489 = vmatpush1.msra.mxu0 0.0
    %490 = vmatprep.subr.mxu0 0.0
    %491 = vmatpush1.msra.mxu0 0.0
    %492 = vmatprep.subr.mxu0 0.0
    %493 = vmatpush1.msra.mxu0 0.0
    %494 = vmatprep.subr.mxu0 0.0
    %495 = vmatpush1.msra.mxu0 0.0
    %496 = vmatprep.subr.mxu0 0.0
    %497 = vmatpush1.msra.mxu0 0.0
    %498 = vmatprep.mubr.f32.mxu0 0.0
    %499 = vmatmul.mubr.f32.gmra.mrb[0].mxu0 %v432
    %v500 = vpop.f32.mrb[0].mxu0
    %v501 = vadd.f32 %v201, %v500
    %v502 = vpop.f32.mrb[0].mxu0
    %503 = vdwg.mxu0
    %v505 = vrot.slane %v501, 4
    %v507 = vadd.f32 %v281, %v505
    %v508 = vxor.u32 %v507, 2147483648
    %v509 = vmul.f32 %v508, 1.442695
    %v510 = vpow.pop %v509
    %v511 = vadd.f32 %v510, 1.0
    %v512 = vrcp.pop %v511
    %v513 = vmul.f32 1.0, %v512
    %514 = vrot.lane.b32.xlu0 %v505, 64
    %v515 = vpop.permute.xlu0 %514
    %v517 = vmul.f32 %v513, %v515
    %519 = vrot.lane.b32.xlu0 %v517, 64
    %v520 = vpop.permute.xlu0 %519
    %v522 = vadd.f32 %v281, %v520
    %v523 = vtanh.pop %v522
    %v524 = vsub.f32 1.0, %v513
    %526 = vrot.lane.b32.xlu0 %v523, 96
    %v527 = vpop.permute.xlu0 %526
    %v529 = vmul.f32 %v524, %v527
    %v530 = vrot.slane %v420, 6
    %v532 = vmul.f32 %v513, %v530
    %v533 = vadd.f32 %v529, %v532
    %535 = vrot.lane.b32.xlu0 %v533, 96
    %v536 = vpop.permute.xlu0 %535
    %vm538 = vcmask 128004
    %539 = vst.msk [vmem:[#allocation2] sm:$0x30] %vm538, %v536
    %vm540 = vcmask 259204
    %541 = vst.msk [vmem:[#allocation2 + $0x6] sm:$0x30] %vm540, %v536
    %v542 = vrot.slane %v533, 4
    %543 = vrot.lane.b32.xlu0 %v542, 96
    %v544 = vpop.permute.xlu0 %543
    %v545 = vsel %vm95, %v544, 0
    %547 = vmatprep.subr.mxu0 0.0
    %548 = vmatpush1.msra.mxu0 %v192
    %549 = vmatprep.subr.mxu0 0.0
    %550 = vmatpush1.msra.mxu0 %v193
    %551 = vmatprep.subr.mxu0 0.0
    %552 = vmatpush1.msra.mxu0 %v194
    %553 = vmatprep.subr.mxu0 0.0
    %554 = vmatpush1.msra.mxu0 %v195
    %555 = vmatprep.subr.mxu0 0.0
    %556 = vmatpush1.msra.mxu0 0.0
    %557 = vmatprep.subr.mxu0 0.0
    %558 = vmatpush1.msra.mxu0 0.0
    %559 = vmatprep.subr.mxu0 0.0
    %560 = vmatpush1.msra.mxu0 0.0
    %561 = vmatprep.subr.mxu0 0.0
    %562 = vmatpush1.msra.mxu0 0.0
    %563 = vmatprep.subr.mxu0 0.0
    %564 = vmatpush1.msra.mxu0 0.0
    %565 = vmatprep.subr.mxu0 0.0
    %566 = vmatpush1.msra.mxu0 0.0
    %567 = vmatprep.subr.mxu0 0.0
    %568 = vmatpush1.msra.mxu0 0.0
    %569 = vmatprep.subr.mxu0 0.0
    %570 = vmatpush1.msra.mxu0 0.0
    %571 = vmatprep.subr.mxu0 0.0
    %572 = vmatpush1.msra.mxu0 0.0
    %573 = vmatprep.subr.mxu0 0.0
    %574 = vmatpush1.msra.mxu0 0.0
    %575 = vmatprep.subr.mxu0 0.0
    %576 = vmatpush1.msra.mxu0 0.0
    %577 = vmatprep.subr.mxu0 0.0
    %578 = vmatpush1.msra.mxu0 0.0
    %579 = vmatprep.subr.mxu0 0.0
    %580 = vmatpush1.msra.mxu0 0.0
    %581 = vmatprep.subr.mxu0 0.0
    %582 = vmatpush1.msra.mxu0 0.0
    %583 = vmatprep.subr.mxu0 0.0
    %584 = vmatpush1.msra.mxu0 0.0
    %585 = vmatprep.subr.mxu0 0.0
    %586 = vmatpush1.msra.mxu0 0.0
    %587 = vmatprep.subr.mxu0 0.0
    %588 = vmatpush1.msra.mxu0 0.0
    %589 = vmatprep.subr.mxu0 0.0
    %590 = vmatpush1.msra.mxu0 0.0
    %591 = vmatprep.subr.mxu0 0.0
    %592 = vmatpush1.msra.mxu0 0.0
    %593 = vmatprep.subr.mxu0 0.0
    %594 = vmatpush1.msra.mxu0 0.0
    %595 = vmatprep.subr.mxu0 0.0
    %596 = vmatpush1.msra.mxu0 0.0
    %597 = vmatprep.subr.mxu0 0.0
    %598 = vmatpush1.msra.mxu0 0.0
    %599 = vmatprep.subr.mxu0 0.0
    %600 = vmatpush1.msra.mxu0 0.0
    %601 = vmatprep.subr.mxu0 0.0
    %602 = vmatpush1.msra.mxu0 0.0
    %603 = vmatprep.subr.mxu0 0.0
    %604 = vmatpush1.msra.mxu0 0.0
    %605 = vmatprep.subr.mxu0 0.0
    %606 = vmatpush1.msra.mxu0 0.0
    %607 = vmatprep.subr.mxu0 0.0
    %608 = vmatpush1.msra.mxu0 0.0
    %609 = vmatprep.subr.mxu0 0.0
    %610 = vmatpush1.msra.mxu0 0.0
    %611 = vmatprep.mubr.f32.mxu0 0.0
    %612 = vmatmul.mubr.f32.gmra.mrb[0].mxu0 %v545
    %v613 = vpop.f32.mrb[0].mxu0
    %v614 = vadd.f32 %v201, %v613
    %v615 = vpop.f32.mrb[0].mxu0
    %616 = vdwg.mxu0
    %v618 = vrot.slane %v614, 2
    %v620 = vadd.f32 %v390, %v618
    %v621 = vxor.u32 %v620, 2147483648
    %v622 = vmul.f32 %v621, 1.442695
    %v623 = vpow.pop %v622
    %v624 = vadd.f32 %v623, 1.0
    %v625 = vrcp.pop %v624
    %v626 = vmul.f32 1.0, %v625
    %627 = vrot.lane.b32.xlu0 %v618, 64
    %v628 = vpop.permute.xlu0 %627
    %v630 = vmul.f32 %v626, %v628
    %632 = vrot.lane.b32.xlu0 %v630, 64
    %v633 = vpop.permute.xlu0 %632
    %v635 = vadd.f32 %v390, %v633
    %v636 = vtanh.pop %v635
    %v637 = vsub.f32 1.0, %v626
    %639 = vrot.lane.b32.xlu0 %v636, 96
    %v640 = vpop.permute.xlu0 %639
    %v642 = vmul.f32 %v637, %v640
    %v643 = vrot.slane %v533, 6
    %v645 = vmul.f32 %v626, %v643
    %v646 = vadd.f32 %v642, %v645
    %648 = vrot.lane.b32.xlu0 %v646, 96
    %v649 = vpop.permute.xlu0 %648
    %vm651 = vcmask 130054
    %652 = vst.msk [vmem:[#allocation2] sm:$0xc0] %vm651, %v649
    %vm653 = vcmask 261254
    %654 = vst.msk [vmem:[#allocation2 + $0x2] sm:$0xc0] %vm653, %v649
    %v655 = vrot.slane %v646, 6
    %656 = vrot.lane.b32.xlu0 %v655, 96
    %v657 = vpop.permute.xlu0 %656
    %v658 = vsel %vm95, %v657, 0
    %660 = vmatprep.subr.mxu0 0.0
    %661 = vmatpush1.msra.mxu0 %v192
    %662 = vmatprep.subr.mxu0 0.0
    %663 = vmatpush1.msra.mxu0 %v193
    %664 = vmatprep.subr.mxu0 0.0
    %665 = vmatpush1.msra.mxu0 %v194
    %666 = vmatprep.subr.mxu0 0.0
    %667 = vmatpush1.msra.mxu0 %v195
    %668 = vmatprep.subr.mxu0 0.0
    %669 = vmatpush1.msra.mxu0 0.0
    %670 = vmatprep.subr.mxu0 0.0
    %671 = vmatpush1.msra.mxu0 0.0
    %672 = vmatprep.subr.mxu0 0.0
    %673 = vmatpush1.msra.mxu0 0.0
    %674 = vmatprep.subr.mxu0 0.0
    %675 = vmatpush1.msra.mxu0 0.0
    %676 = vmatprep.subr.mxu0 0.0
    %677 = vmatpush1.msra.mxu0 0.0
    %678 = vmatprep.subr.mxu0 0.0
    %679 = vmatpush1.msra.mxu0 0.0
    %680 = vmatprep.subr.mxu0 0.0
    %681 = vmatpush1.msra.mxu0 0.0
    %682 = vmatprep.subr.mxu0 0.0
    %683 = vmatpush1.msra.mxu0 0.0
    %684 = vmatprep.subr.mxu0 0.0
    %685 = vmatpush1.msra.mxu0 0.0
    %686 = vmatprep.subr.mxu0 0.0
    %687 = vmatpush1.msra.mxu0 0.0
    %688 = vmatprep.subr.mxu0 0.0
    %689 = vmatpush1.msra.mxu0 0.0
    %690 = vmatprep.subr.mxu0 0.0
    %691 = vmatpush1.msra.mxu0 0.0
    %692 = vmatprep.subr.mxu0 0.0
    %693 = vmatpush1.msra.mxu0 0.0
    %694 = vmatprep.subr.mxu0 0.0
    %695 = vmatpush1.msra.mxu0 0.0
    %696 = vmatprep.subr.mxu0 0.0
    %697 = vmatpush1.msra.mxu0 0.0
    %698 = vmatprep.subr.mxu0 0.0
    %699 = vmatpush1.msra.mxu0 0.0
    %700 = vmatprep.subr.mxu0 0.0
    %701 = vmatpush1.msra.mxu0 0.0
    %702 = vmatprep.subr.mxu0 0.0
    %703 = vmatpush1.msra.mxu0 0.0
    %704 = vmatprep.subr.mxu0 0.0
    %705 = vmatpush1.msra.mxu0 0.0
    %706 = vmatprep.subr.mxu0 0.0
    %707 = vmatpush1.msra.mxu0 0.0
    %708 = vmatprep.subr.mxu0 0.0
    %709 = vmatpush1.msra.mxu0 0.0
    %710 = vmatprep.subr.mxu0 0.0
    %711 = vmatpush1.msra.mxu0 0.0
    %712 = vmatprep.subr.mxu0 0.0
    %713 = vmatpush1.msra.mxu0 0.0
    %714 = vmatprep.subr.mxu0 0.0
    %715 = vmatpush1.msra.mxu0 0.0
    %716 = vmatprep.subr.mxu0 0.0
    %717 = vmatpush1.msra.mxu0 0.0
    %718 = vmatprep.subr.mxu0 0.0
    %719 = vmatpush1.msra.mxu0 0.0
    %720 = vmatprep.subr.mxu0 0.0
    %721 = vmatpush1.msra.mxu0 0.0
    %722 = vmatprep.subr.mxu0 0.0
    %723 = vmatpush1.msra.mxu0 0.0
    %724 = vmatprep.mubr.f32.mxu0 0.0
    %725 = vmatmul.mubr.f32.gmra.mrb[0].mxu0 %v658
    %v726 = vpop.f32.mrb[0].mxu0
    %v727 = vadd.f32 %v201, %v726
    %v728 = vpop.f32.mrb[0].mxu0
    %729 = vdwg.mxu0
    %v731 = vrot.slane %v169, 6
    %v733 = vsel %vm277, %v174, %v731
    %v734 = vadd.f32 %v733, %v727
    %v735 = vxor.u32 %v734, 2147483648
    %v736 = vmul.f32 %v735, 1.442695
    %v737 = vpow.pop %v736
    %v738 = vadd.f32 %v737, 1.0
    %v739 = vrcp.pop %v738
    %v740 = vmul.f32 1.0, %v739
    %742 = vrot.lane.b32.xlu0 %v727, 64
    %v743 = vpop.permute.xlu0 %742
    %v745 = vmul.f32 %v740, %v743
    %747 = vrot.lane.b32.xlu0 %v745, 64
    %v748 = vpop.permute.xlu0 %747
    %v750 = vadd.f32 %v733, %v748
    %v751 = vtanh.pop %v750
    %v752 = vsub.f32 1.0, %v740
    %754 = vrot.lane.b32.xlu0 %v751, 96
    %v755 = vpop.permute.xlu0 %754
    %v757 = vmul.f32 %v752, %v755
    %v759 = vmul.f32 %v740, %v655
    %v760 = vadd.f32 %v757, %v759
    %762 = vrot.lane.b32.xlu0 %v760, 96
    %v763 = vpop.permute.xlu0 %762
    %765 = vst.msk [vmem:[#allocation2 + $0x8] sm:$0x3] %vm312, %v763
    %766 = vst.msk [vmem:[#allocation2 + $0x6] sm:$0x3] %vm314, %v763
    %v767 = vsel %vm95, %v763, 0
    %769 = vmatprep.subr.mxu0 0.0
    %770 = vmatpush1.msra.mxu0 %v192
    %771 = vmatprep.subr.mxu0 0.0
    %772 = vmatpush1.msra.mxu0 %v193
    %773 = vmatprep.subr.mxu0 0.0
    %774 = vmatpush1.msra.mxu0 %v194
    %775 = vmatprep.subr.mxu0 0.0
    %776 = vmatpush1.msra.mxu0 %v195
    %777 = vmatprep.subr.mxu0 0.0
    %778 = vmatpush1.msra.mxu0 0.0
    %779 = vmatprep.subr.mxu0 0.0
    %780 = vmatpush1.msra.mxu0 0.0
    %781 = vmatprep.subr.mxu0 0.0
    %782 = vmatpush1.msra.mxu0 0.0
    %783 = vmatprep.subr.mxu0 0.0
    %784 = vmatpush1.msra.mxu0 0.0
    %785 = vmatprep.subr.mxu0 0.0
    %786 = vmatpush1.msra.mxu0 0.0
    %787 = vmatprep.subr.mxu0 0.0
    %788 = vmatpush1.msra.mxu0 0.0
    %789 = vmatprep.subr.mxu0 0.0
    %790 = vmatpush1.msra.mxu0 0.0
    %791 = vmatprep.subr.mxu0 0.0
    %792 = vmatpush1.msra.mxu0 0.0
    %793 = vmatprep.subr.mxu0 0.0
    %794 = vmatpush1.msra.mxu0 0.0
    %795 = vmatprep.subr.mxu0 0.0
    %796 = vmatpush1.msra.mxu0 0.0
    %797 = vmatprep.subr.mxu0 0.0
    %798 = vmatpush1.msra.mxu0 0.0
    %799 = vmatprep.subr.mxu0 0.0
    %800 = vmatpush1.msra.mxu0 0.0
    %801 = vmatprep.subr.mxu0 0.0
    %802 = vmatpush1.msra.mxu0 0.0
    %803 = vmatprep.subr.mxu0 0.0
    %804 = vmatpush1.msra.mxu0 0.0
    %805 = vmatprep.subr.mxu0 0.0
    %806 = vmatpush1.msra.mxu0 0.0
    %807 = vmatprep.subr.mxu0 0.0
    %808 = vmatpush1.msra.mxu0 0.0
    %809 = vmatprep.subr.mxu0 0.0
    %810 = vmatpush1.msra.mxu0 0.0
    %811 = vmatprep.subr.mxu0 0.0
    %812 = vmatpush1.msra.mxu0 0.0
    %813 = vmatprep.subr.mxu0 0.0
    %814 = vmatpush1.msra.mxu0 0.0
    %815 = vmatprep.subr.mxu0 0.0
    %816 = vmatpush1.msra.mxu0 0.0
    %817 = vmatprep.subr.mxu0 0.0
    %818 = vmatpush1.msra.mxu0 0.0
    %819 = vmatprep.subr.mxu0 0.0
    %820 = vmatpush1.msra.mxu0 0.0
    %821 = vmatprep.subr.mxu0 0.0
    %822 = vmatpush1.msra.mxu0 0.0
    %823 = vmatprep.subr.mxu0 0.0
    %824 = vmatpush1.msra.mxu0 0.0
    %825 = vmatprep.subr.mxu0 0.0
    %826 = vmatpush1.msra.mxu0 0.0
    %827 = vmatprep.subr.mxu0 0.0
    %828 = vmatpush1.msra.mxu0 0.0
    %829 = vmatprep.subr.mxu0 0.0
    %830 = vmatpush1.msra.mxu0 0.0
    %831 = vmatprep.subr.mxu0 0.0
    %832 = vmatpush1.msra.mxu0 0.0
    %833 = vmatprep.mubr.f32.mxu0 0.0
    %834 = vmatmul.mubr.f32.gmra.mrb[0].mxu0 %v767
    %v835 = vpop.f32.mrb[0].mxu0
    %v836 = vadd.f32 %v201, %v835
    %v837 = vpop.f32.mrb[0].mxu0
    %838 = vdwg.mxu0
    %v839 = vrot.slane %v169, 2
    %v841 = vsel %vm277, %v174, %v839
    %v843 = vrot.slane %v836, 6
    %v845 = vadd.f32 %v841, %v843
    %v846 = vxor.u32 %v845, 2147483648
    %v847 = vmul.f32 %v846, 1.442695
    %v848 = vpow.pop %v847
    %v849 = vadd.f32 %v848, 1.0
    %v850 = vrcp.pop %v849
    %v851 = vmul.f32 1.0, %v850
    %852 = vrot.lane.b32.xlu0 %v843, 64
    %v853 = vpop.permute.xlu0 %852
    %v855 = vmul.f32 %v851, %v853
    %857 = vrot.lane.b32.xlu0 %v855, 64
    %v858 = vpop.permute.xlu0 %857
    %v860 = vadd.f32 %v841, %v858
    %v861 = vtanh.pop %v860
    %v862 = vsub.f32 1.0, %v851
    %864 = vrot.lane.b32.xlu0 %v861, 96
    %v865 = vpop.permute.xlu0 %864
    %v867 = vmul.f32 %v862, %v865
    %v868 = vrot.slane %v760, 6
    %v870 = vmul.f32 %v851, %v868
    %v871 = vadd.f32 %v867, %v870
    %873 = vrot.lane.b32.xlu0 %v871, 96
    %v874 = vpop.permute.xlu0 %873
    %876 = vst.msk [vmem:[#allocation2 + $0x8] sm:$0xc] %vm425, %v874
    %877 = vst.msk [vmem:[#allocation2 + $0x2] sm:$0xc] %vm427, %v874
    %v878 = vrot.slane %v871, 2
    %879 = vrot.lane.b32.xlu0 %v878, 96
    %v880 = vpop.permute.xlu0 %879
    %v881 = vsel %vm95, %v880, 0
    %883 = vmatprep.subr.mxu0 0.0
    %884 = vmatpush1.msra.mxu0 %v192
    %885 = vmatprep.subr.mxu0 0.0
    %886 = vmatpush1.msra.mxu0 %v193
    %887 = vmatprep.subr.mxu0 0.0
    %888 = vmatpush1.msra.mxu0 %v194
    %889 = vmatprep.subr.mxu0 0.0
    %890 = vmatpush1.msra.mxu0 %v195
    %891 = vmatprep.subr.mxu0 0.0
    %892 = vmatpush1.msra.mxu0 0.0
    %893 = vmatprep.subr.mxu0 0.0
    %894 = vmatpush1.msra.mxu0 0.0
    %895 = vmatprep.subr.mxu0 0.0
    %896 = vmatpush1.msra.mxu0 0.0
    %897 = vmatprep.subr.mxu0 0.0
    %898 = vmatpush1.msra.mxu0 0.0
    %899 = vmatprep.subr.mxu0 0.0
    %900 = vmatpush1.msra.mxu0 0.0
    %901 = vmatprep.subr.mxu0 0.0
    %902 = vmatpush1.msra.mxu0 0.0
    %903 = vmatprep.subr.mxu0 0.0
    %904 = vmatpush1.msra.mxu0 0.0
    %905 = vmatprep.subr.mxu0 0.0
    %906 = vmatpush1.msra.mxu0 0.0
    %907 = vmatprep.subr.mxu0 0.0
    %908 = vmatpush1.msra.mxu0 0.0
    %909 = vmatprep.subr.mxu0 0.0
    %910 = vmatpush1.msra.mxu0 0.0
    %911 = vmatprep.subr.mxu0 0.0
    %912 = vmatpush1.msra.mxu0 0.0
    %913 = vmatprep.subr.mxu0 0.0
    %914 = vmatpush1.msra.mxu0 0.0
    %915 = vmatprep.subr.mxu0 0.0
    %916 = vmatpush1.msra.mxu0 0.0
    %917 = vmatprep.subr.mxu0 0.0
    %918 = vmatpush1.msra.mxu0 0.0
    %919 = vmatprep.subr.mxu0 0.0
    %920 = vmatpush1.msra.mxu0 0.0
    %921 = vmatprep.subr.mxu0 0.0
    %922 = vmatpush1.msra.mxu0 0.0
    %923 = vmatprep.subr.mxu0 0.0
    %924 = vmatpush1.msra.mxu0 0.0
    %925 = vmatprep.subr.mxu0 0.0
    %926 = vmatpush1.msra.mxu0 0.0
    %927 = vmatprep.subr.mxu0 0.0
    %928 = vmatpush1.msra.mxu0 0.0
    %929 = vmatprep.subr.mxu0 0.0
    %930 = vmatpush1.msra.mxu0 0.0
    %931 = vmatprep.subr.mxu0 0.0
    %932 = vmatpush1.msra.mxu0 0.0
    %933 = vmatprep.subr.mxu0 0.0
    %934 = vmatpush1.msra.mxu0 0.0
    %935 = vmatprep.subr.mxu0 0.0
    %936 = vmatpush1.msra.mxu0 0.0
    %937 = vmatprep.subr.mxu0 0.0
    %938 = vmatpush1.msra.mxu0 0.0
    %939 = vmatprep.subr.mxu0 0.0
    %940 = vmatpush1.msra.mxu0 0.0
    %941 = vmatprep.subr.mxu0 0.0
    %942 = vmatpush1.msra.mxu0 0.0
    %943 = vmatprep.subr.mxu0 0.0
    %944 = vmatpush1.msra.mxu0 0.0
    %945 = vmatprep.subr.mxu0 0.0
    %946 = vmatpush1.msra.mxu0 0.0
    %947 = vmatprep.mubr.f32.mxu0 0.0
    %948 = vmatmul.mubr.f32.gmra.mrb[0].mxu0 %v881
    %v949 = vpop.f32.mrb[0].mxu0
    %v950 = vadd.f32 %v201, %v949
    %v951 = vpop.f32.mrb[0].mxu0
    %952 = vdwg.mxu0
    %v954 = vrot.slane %v950, 4
    %v956 = vadd.f32 %v733, %v954
    %v957 = vxor.u32 %v956, 2147483648
    %v958 = vmul.f32 %v957, 1.442695
    %v959 = vpow.pop %v958
    %v960 = vadd.f32 %v959, 1.0
    %v961 = vrcp.pop %v960
    %v962 = vmul.f32 1.0, %v961
    %963 = vrot.lane.b32.xlu0 %v954, 64
    %v964 = vpop.permute.xlu0 %963
    %v966 = vmul.f32 %v962, %v964
    %968 = vrot.lane.b32.xlu0 %v966, 64
    %v969 = vpop.permute.xlu0 %968
    %v971 = vadd.f32 %v733, %v969
    %v972 = vtanh.pop %v971
    %v973 = vsub.f32 1.0, %v962
    %975 = vrot.lane.b32.xlu0 %v972, 96
    %v976 = vpop.permute.xlu0 %975
    %v978 = vmul.f32 %v973, %v976
    %v979 = vrot.slane %v871, 6
    %v981 = vmul.f32 %v962, %v979
    %v982 = vadd.f32 %v978, %v981
    %984 = vrot.lane.b32.xlu0 %v982, 96
    %v985 = vpop.permute.xlu0 %984
    %987 = vst.msk [vmem:[#allocation2 + $0x8] sm:$0x30] %vm538, %v985
    %988 = vst.msk [vmem:[#allocation2 - $0x2] sm:$0x30] %vm540, %v985
    %v989 = vrot.slane %v982, 4
    %990 = vrot.lane.b32.xlu0 %v989, 96
    %v991 = vpop.permute.xlu0 %990
    %v992 = vsel %vm95, %v991, 0
    %994 = vmatprep.subr.mxu0 0.0
    %995 = vmatpush1.msra.mxu0 %v192
    %996 = vmatprep.subr.mxu0 0.0
    %997 = vmatpush1.msra.mxu0 %v193
    %998 = vmatprep.subr.mxu0 0.0
    %999 = vmatpush1.msra.mxu0 %v194
    %1000 = vmatprep.subr.mxu0 0.0
    %1001 = vmatpush1.msra.mxu0 %v195
    %1002 = vmatprep.subr.mxu0 0.0
    %1003 = vmatpush1.msra.mxu0 0.0
    %1004 = vmatprep.subr.mxu0 0.0
    %1005 = vmatpush1.msra.mxu0 0.0
    %1006 = vmatprep.subr.mxu0 0.0
    %1007 = vmatpush1.msra.mxu0 0.0
    %1008 = vmatprep.subr.mxu0 0.0
    %1009 = vmatpush1.msra.mxu0 0.0
    %1010 = vmatprep.subr.mxu0 0.0
    %1011 = vmatpush1.msra.mxu0 0.0
    %1012 = vmatprep.subr.mxu0 0.0
    %1013 = vmatpush1.msra.mxu0 0.0
    %1014 = vmatprep.subr.mxu0 0.0
    %1015 = vmatpush1.msra.mxu0 0.0
    %1016 = vmatprep.subr.mxu0 0.0
    %1017 = vmatpush1.msra.mxu0 0.0
    %1018 = vmatprep.subr.mxu0 0.0
    %1019 = vmatpush1.msra.mxu0 0.0
    %1020 = vmatprep.subr.mxu0 0.0
    %1021 = vmatpush1.msra.mxu0 0.0
    %1022 = vmatprep.subr.mxu0 0.0
    %1023 = vmatpush1.msra.mxu0 0.0
    %1024 = vmatprep.subr.mxu0 0.0
    %1025 = vmatpush1.msra.mxu0 0.0
    %1026 = vmatprep.subr.mxu0 0.0
    %1027 = vmatpush1.msra.mxu0 0.0
    %1028 = vmatprep.subr.mxu0 0.0
    %1029 = vmatpush1.msra.mxu0 0.0
    %1030 = vmatprep.subr.mxu0 0.0
    %1031 = vmatpush1.msra.mxu0 0.0
    %1032 = vmatprep.subr.mxu0 0.0
    %1033 = vmatpush1.msra.mxu0 0.0
    %1034 = vmatprep.subr.mxu0 0.0
    %1035 = vmatpush1.msra.mxu0 0.0
    %1036 = vmatprep.subr.mxu0 0.0
    %1037 = vmatpush1.msra.mxu0 0.0
    %1038 = vmatprep.subr.mxu0 0.0
    %1039 = vmatpush1.msra.mxu0 0.0
    %1040 = vmatprep.subr.mxu0 0.0
    %1041 = vmatpush1.msra.mxu0 0.0
    %1042 = vmatprep.subr.mxu0 0.0
    %1043 = vmatpush1.msra.mxu0 0.0
    %1044 = vmatprep.subr.mxu0 0.0
    %1045 = vmatpush1.msra.mxu0 0.0
    %1046 = vmatprep.subr.mxu0 0.0
    %1047 = vmatpush1.msra.mxu0 0.0
    %1048 = vmatprep.subr.mxu0 0.0
    %1049 = vmatpush1.msra.mxu0 0.0
    %1050 = vmatprep.subr.mxu0 0.0
    %1051 = vmatpush1.msra.mxu0 0.0
    %1052 = vmatprep.subr.mxu0 0.0
    %1053 = vmatpush1.msra.mxu0 0.0
    %1054 = vmatprep.subr.mxu0 0.0
    %1055 = vmatpush1.msra.mxu0 0.0
    %1056 = vmatprep.subr.mxu0 0.0
    %1057 = vmatpush1.msra.mxu0 0.0
    %1058 = vmatprep.mubr.f32.mxu0 0.0
    %1059 = vmatmul.mubr.f32.gmra.mrb[0].mxu0 %v992
    %v1060 = vpop.f32.mrb[0].mxu0
    %v1061 = vadd.f32 %v201, %v1060
    %v1062 = vpop.f32.mrb[0].mxu0
    %1063 = vdwg.mxu0
    %v1065 = vrot.slane %v1061, 2
    %v1067 = vadd.f32 %v841, %v1065
    %v1068 = vxor.u32 %v1067, 2147483648
    %v1069 = vmul.f32 %v1068, 1.442695
    %v1070 = vpow.pop %v1069
    %v1071 = vadd.f32 %v1070, 1.0
    %v1072 = vrcp.pop %v1071
    %v1073 = vmul.f32 1.0, %v1072
    %1074 = vrot.lane.b32.xlu0 %v1065, 64
    %v1075 = vpop.permute.xlu0 %1074
    %v1077 = vmul.f32 %v1073, %v1075
    %1079 = vrot.lane.b32.xlu0 %v1077, 64
    %v1080 = vpop.permute.xlu0 %1079
    %v1082 = vadd.f32 %v841, %v1080
    %v1083 = vtanh.pop %v1082
    %v1084 = vsub.f32 1.0, %v1073
    %1086 = vrot.lane.b32.xlu0 %v1083, 96
    %v1087 = vpop.permute.xlu0 %1086
    %v1089 = vmul.f32 %v1084, %v1087
    %v1090 = vrot.slane %v982, 6
    %v1092 = vmul.f32 %v1073, %v1090
    %v1093 = vadd.f32 %v1089, %v1092
    %1095 = vrot.lane.b32.xlu0 %v1093, 96
    %v1096 = vpop.permute.xlu0 %1095
    %1098 = vst.msk [vmem:[#allocation2 + $0x8] sm:$0xc0] %vm651, %v1096
    %1099 = vst.msk [vmem:[#allocation2 - $0x6] sm:$0xc0] %vm653, %v1096
    %1100 = vst.msk [vmem:[#allocation12 - $0x6] sm:$0xc0] %vm651, %v1096
    %1101 = vrot.lane.b32.xlu0 %v1093, 80
    %v1102 = vpop.permute.xlu0 %1101
    %s1104 = scalar_lea.vmem [#allocation12], 2
    %1105 = vst.msk [vmem:[%s1104 - $0x6] sm:$0xc0] %vm651, %v1102
    %v1106 = vld [vmem:[#allocation2] sm:$0xff]
    %v1107 = vld [vmem:[#allocation2 + $0x8] sm:$0xff]
    %v1108 = vld [vmem:[%s5] sm:$0xff]
    %v1109 = vld [vmem:[%s5 + $0x8] sm:$0xff]
    %v1110 = vld [vmem:[%s5 + $0x10] sm:$0xff]
    %v1111 = vld [vmem:[%s5 + $0x18] sm:$0xff]
    %v1112 = vld [vmem:[%s5 + $0x20] sm:$0xff]
    %v1113 = vld [vmem:[%s5 + $0x28] sm:$0xff]
    %v1114 = vld [vmem:[%s5 + $0x30] sm:$0xff]
    %v1115 = vld [vmem:[%s5 + $0x38] sm:$0xff]
    %v1116 = vld [vmem:[#allocation9] sm:$0x3]
    %v1118 = vlaneseq
    %v1119 = vshrl.u32 %v1118, 7
    %v1120 = vsub.s32 0, %v1119
    %v1121 = vrot.slane %v1116, %v1120
    %v1122 = vlaneseq
    %v1123 = vshrl.u32 %v1122, 7
    %v1124 = vsub.s32 1, %v1123
    %v1125 = vrot.slane %v1116, %v1124
    %v1129 = vsel %vm95, %v1106, 0
    %v1132 = vsel %vm95, %v1107, 0
    %1134 = vmatprep.subr.mxu0 %v1109
    %1135 = vmatpush1.msra.mxu0 %v1108
    %1136 = vmatprep.subr.mxu0 %v1111
    %1137 = vmatpush1.msra.mxu0 %v1110
    %1138 = vmatprep.subr.mxu0 %v1113
    %1139 = vmatpush1.msra.mxu0 %v1112
    %1140 = vmatprep.subr.mxu0 %v1115
    %1141 = vmatpush1.msra.mxu0 %v1114
    %1142 = vmatprep.subr.mxu0 0.0
    %1143 = vmatpush1.msra.mxu0 0.0
    %1144 = vmatprep.subr.mxu0 0.0
    %1145 = vmatpush1.msra.mxu0 0.0
    %1146 = vmatprep.subr.mxu0 0.0
    %1147 = vmatpush1.msra.mxu0 0.0
    %1148 = vmatprep.subr.mxu0 0.0
    %1149 = vmatpush1.msra.mxu0 0.0
    %1150 = vmatprep.subr.mxu0 0.0
    %1151 = vmatpush1.msra.mxu0 0.0
    %1152 = vmatprep.subr.mxu0 0.0
    %1153 = vmatpush1.msra.mxu0 0.0
    %1154 = vmatprep.subr.mxu0 0.0
    %1155 = vmatpush1.msra.mxu0 0.0
    %1156 = vmatprep.subr.mxu0 0.0
    %1157 = vmatpush1.msra.mxu0 0.0
    %1158 = vmatprep.subr.mxu0 0.0
    %1159 = vmatpush1.msra.mxu0 0.0
    %1160 = vmatprep.subr.mxu0 0.0
    %1161 = vmatpush1.msra.mxu0 0.0
    %1162 = vmatprep.subr.mxu0 0.0
    %1163 = vmatpush1.msra.mxu0 0.0
    %1164 = vmatprep.subr.mxu0 0.0
    %1165 = vmatpush1.msra.mxu0 0.0
    %1166 = vmatprep.subr.mxu0 0.0
    %1167 = vmatpush1.msra.mxu0 0.0
    %1168 = vmatprep.subr.mxu0 0.0
    %1169 = vmatpush1.msra.mxu0 0.0
    %1170 = vmatprep.subr.mxu0 0.0
    %1171 = vmatpush1.msra.mxu0 0.0
    %1172 = vmatprep.subr.mxu0 0.0
    %1173 = vmatpush1.msra.mxu0 0.0
    %1174 = vmatprep.subr.mxu0 0.0
    %1175 = vmatpush1.msra.mxu0 0.0
    %1176 = vmatprep.subr.mxu0 0.0
    %1177 = vmatpush1.msra.mxu0 0.0
    %1178 = vmatprep.subr.mxu0 0.0
    %1179 = vmatpush1.msra.mxu0 0.0
    %1180 = vmatprep.subr.mxu0 0.0
    %1181 = vmatpush1.msra.mxu0 0.0
    %1182 = vmatprep.subr.mxu0 0.0
    %1183 = vmatpush1.msra.mxu0 0.0
    %1184 = vmatprep.subr.mxu0 0.0
    %1185 = vmatpush1.msra.mxu0 0.0
    %1186 = vmatprep.subr.mxu0 0.0
    %1187 = vmatpush1.msra.mxu0 0.0
    %1188 = vmatprep.subr.mxu0 0.0
    %1189 = vmatpush1.msra.mxu0 0.0
    %1190 = vmatprep.subr.mxu0 0.0
    %1191 = vmatpush1.msra.mxu0 0.0
    %1192 = vmatprep.subr.mxu0 0.0
    %1193 = vmatpush1.msra.mxu0 0.0
    %1194 = vmatprep.subr.mxu0 0.0
    %1195 = vmatpush1.msra.mxu0 0.0
    %1196 = vmatprep.subr.mxu0 0.0
    %1197 = vmatpush1.msra.mxu0 0.0
    %1198 = vmatprep.mubr.f32.mxu0 0.0
    %1199 = vmatmul.mubr.f32.gmra.mrb[0].mxu0 %v1129
    %v1200 = vpop.f32.mrb[0].mxu0
    %v1201 = vadd.f32 %v1121, %v1200
    %v1202 = vpop.f32.mrb[0].mxu0
    %v1203 = vadd.f32 %v1125, %v1202
    %1204 = vmatprep.mubr.f32.mxu0 0.0
    %1205 = vmatmul.mubr.f32.gmra.mrb[0].mxu0 %v1132
    %v1206 = vpop.f32.mrb[0].mxu0
    %v1207 = vadd.f32 %v1121, %v1206
    %v1208 = vpop.f32.mrb[0].mxu0
    %v1209 = vadd.f32 %v1125, %v1208
    %1210 = vdwg.mxu0
    %v1211 = vtanh.pop %v1201
    %v1212 = vtanh.pop %v1203
    %v1213 = vtanh.pop %v1207
    %v1214 = vtanh.pop %v1209
    %v1215 = vld [vmem:[%s7] sm:$0x3]
    %v1217 = vlaneseq
    %v1218 = vshrl.u32 %v1217, 7
    %v1219 = vsub.s32 0, %v1218
    %v1220 = vrot.slane %v1215, %v1219
    %v1221 = vlaneseq
    %v1222 = vshrl.u32 %v1221, 7
    %v1223 = vsub.s32 1, %v1222
    %v1224 = vrot.slane %v1215, %v1223
    %v1227 = vmul.f32 %v1211, %v1220
    %v1228 = vmul.f32 %v1212, %v1224
    %v1229 = vmul.f32 %v1213, %v1220
    %v1230 = vmul.f32 %v1214, %v1224
    %v1231 = vsel %vm95, %v1227, 0.0
    %1232 = vadd.xlane.f32.xlu0 %v1231
    %v1233 = vpop.xlane.xlu0 %1232
    %v1234 = vsel %vm95, %v1229, 0.0
    %1235 = vadd.xlane.f32.xlu0 %v1234
    %v1236 = vpop.xlane.xlu0 %1235
    %1239 = vrot.lane.b32.xlu0 %v1227, 96
    %v1240 = vpop.permute.xlu0 %1239
    %1241 = vrot.lane.b32.xlu0 %v1229, 96
    %v1242 = vpop.permute.xlu0 %1241
    %v1245 = vsel %vm95, %v1240, 0.0
    %1246 = vadd.xlane.f32.xlu0 %v1245
    %v1247 = vpop.xlane.xlu0 %1246
    %v1248 = vsel %vm95, %v1242, 0.0
    %1249 = vadd.xlane.f32.xlu0 %v1248
    %v1250 = vpop.xlane.xlu0 %1249
    %1251 = vrot.lane.b32.xlu0 %v1227, 64
    %v1252 = vpop.permute.xlu0 %1251
    %1253 = vrot.lane.b32.xlu0 %v1229, 64
    %v1254 = vpop.permute.xlu0 %1253
    %v1257 = vsel %vm95, %v1252, 0.0
    %1258 = vadd.xlane.f32.xlu0 %v1257
    %v1259 = vpop.xlane.xlu0 %1258
    %v1260 = vsel %vm95, %v1254, 0.0
    %1261 = vadd.xlane.f32.xlu0 %v1260
    %v1262 = vpop.xlane.xlu0 %1261
    %1263 = vrot.lane.b32.xlu0 %v1227, 32
    %v1264 = vpop.permute.xlu0 %1263
    %1265 = vrot.lane.b32.xlu0 %v1229, 32
    %v1266 = vpop.permute.xlu0 %1265
    %v1269 = vsel %vm95, %v1264, 0.0
    %1270 = vadd.xlane.f32.xlu0 %v1269
    %v1271 = vpop.xlane.xlu0 %1270
    %v1272 = vsel %vm95, %v1266, 0.0
    %1273 = vadd.xlane.f32.xlu0 %v1272
    %v1274 = vpop.xlane.xlu0 %1273
    %v1275 = vsel %vm95, %v1228, 0.0
    %1276 = vadd.xlane.f32.xlu0 %v1275
    %v1277 = vpop.xlane.xlu0 %1276
    %v1278 = vsel %vm95, %v1230, 0.0
    %1279 = vadd.xlane.f32.xlu0 %v1278
    %v1280 = vpop.xlane.xlu0 %1279
    %1283 = vrot.lane.b32.xlu0 %v1228, 96
    %v1284 = vpop.permute.xlu0 %1283
    %1285 = vrot.lane.b32.xlu0 %v1230, 96
    %v1286 = vpop.permute.xlu0 %1285
    %v1289 = vsel %vm95, %v1284, 0.0
    %1290 = vadd.xlane.f32.xlu0 %v1289
    %v1291 = vpop.xlane.xlu0 %1290
    %v1292 = vsel %vm95, %v1286, 0.0
    %1293 = vadd.xlane.f32.xlu0 %v1292
    %v1294 = vpop.xlane.xlu0 %1293
    %vm1295 = vcmask 7168
    %v1296 = vsel %vm1295, %v1233, %v1247
    %v1297 = vsel %vm1295, %v1236, %v1250
    %vm1298 = vcmask 15360
    %v1299 = vsel %vm1298, %v1296, %v1259
    %v1300 = vsel %vm1298, %v1297, %v1262
    %vm1301 = vcmask 23552
    %v1302 = vsel %vm1301, %v1299, %v1271
    %v1303 = vsel %vm1301, %v1300, %v1274
    %vm1304 = vcmask 31744
    %v1305 = vsel %vm1304, %v1302, %v1277
    %v1306 = vsel %vm1304, %v1303, %v1280
    %vm1307 = vcmask 39936
    %v1308 = vsel %vm1307, %v1305, %v1291
    %v1309 = vsel %vm1307, %v1306, %v1294
    %v1312 = vcombine.high %v1308, %v1308
    %v1314 = vunpack.c.l.s4 1983009808
    %v1315 = vunpack.c.0.s8 %v1314
    %v1316 = vlaneseq
    %v1317 = vshrl.u32 %v1316, 7
    %v1318 = vsub.s32 %v1315, %v1317
    %v1319 = vrot.slane %v1308, %v1318
    %v1321 = vunpack.c.l.s4 1983009808
    %v1322 = vunpack.c.0.s8 %v1321
    %v1323 = vlaneseq
    %v1324 = vshrl.u32 %v1323, 7
    %v1325 = vsub.s32 %v1322, %v1324
    %v1326 = vrot.slane %v1312, %v1325
    %v1327 = vcombine.high %v1319, %v1319
    %v1328 = vcombine.high %v1326, %v1326
    %v1329 = vcombine.high %v1309, %v1309
    %v1331 = vunpack.c.l.s4 1983009808
    %v1332 = vunpack.c.0.s8 %v1331
    %v1333 = vlaneseq
    %v1334 = vshrl.u32 %v1333, 7
    %v1335 = vsub.s32 %v1332, %v1334
    %v1336 = vrot.slane %v1309, %v1335
    %v1338 = vunpack.c.l.s4 1983009808
    %v1339 = vunpack.c.0.s8 %v1338
    %v1340 = vlaneseq
    %v1341 = vshrl.u32 %v1340, 7
    %v1342 = vsub.s32 %v1339, %v1341
    %v1343 = vrot.slane %v1329, %v1342
    %v1344 = vcombine.high %v1336, %v1336
    %v1345 = vcombine.high %v1343, %v1343
    %vm1354 = vcmask 41984
    %v1355 = vsel %vm1354, %v1319, -inf
    %v1356 = vsel %vm1354, %v1327, -inf
    %v1357 = vsel %vm1354, %v1326, -inf
    %v1358 = vsel %vm1354, %v1328, -inf
    %v1359 = vsel %vm1354, %v1336, -inf
    %v1360 = vmax.f32 %v1355, %v1359
    %v1361 = vsel %vm1354, %v1344, -inf
    %v1362 = vmax.f32 %v1356, %v1361
    %v1363 = vsel %vm1354, %v1343, -inf
    %v1364 = vmax.f32 %v1357, %v1363
    %v1365 = vsel %vm1354, %v1345, -inf
    %v1366 = vmax.f32 %v1358, %v1365
    %v1367 = vmax.f32 %v1360, %v1362
    %v1368 = vmax.f32 %v1364, %v1366
    %v1369 = vmax.f32 %v1367, %v1368
    %v1370 = vsub.f32 %v1319, %v1369
    %v1371 = vsub.f32 %v1327, %v1369
    %v1372 = vsub.f32 %v1326, %v1369
    %v1373 = vsub.f32 %v1328, %v1369
    %v1374 = vsub.f32 %v1336, %v1369
    %v1375 = vsub.f32 %v1344, %v1369
    %v1376 = vsub.f32 %v1343, %v1369
    %v1377 = vsub.f32 %v1345, %v1369
    %v1378 = vmul.f32 %v1370, 1.442695
    %v1379 = vpow.pop %v1378
    %v1380 = vmul.f32 %v1371, 1.442695
    %v1381 = vpow.pop %v1380
    %v1382 = vmul.f32 %v1372, 1.442695
    %v1383 = vpow.pop %v1382
    %v1384 = vmul.f32 %v1373, 1.442695
    %v1385 = vpow.pop %v1384
    %v1386 = vmul.f32 %v1374, 1.442695
    %v1387 = vpow.pop %v1386
    %v1388 = vmul.f32 %v1375, 1.442695
    %v1389 = vpow.pop %v1388
    %v1390 = vmul.f32 %v1376, 1.442695
    %v1391 = vpow.pop %v1390
    %v1392 = vmul.f32 %v1377, 1.442695
    %v1393 = vpow.pop %v1392
    %v1394 = vsel %vm1354, %v1379, 0.0
    %v1395 = vsel %vm1354, %v1381, 0.0
    %v1396 = vadd.f32 %v1394, %v1395
    %v1397 = vsel %vm1354, %v1383, 0.0
    %v1398 = vadd.f32 %v1396, %v1397
    %v1399 = vsel %vm1354, %v1385, 0.0
    %v1400 = vadd.f32 %v1398, %v1399
    %v1401 = vsel %vm1354, %v1387, 0.0
    %v1402 = vadd.f32 %v1400, %v1401
    %v1403 = vsel %vm1354, %v1389, 0.0
    %v1404 = vadd.f32 %v1402, %v1403
    %v1405 = vsel %vm1354, %v1391, 0.0
    %v1406 = vadd.f32 %v1404, %v1405
    %v1407 = vsel %vm1354, %v1393, 0.0
    %v1408 = vadd.f32 %v1406, %v1407
    %v1409 = vrcp.pop %v1408
    %v1410 = vmul.f32 %v1379, %v1409
    %v1411 = vmul.f32 %v1381, %v1409
    %v1412 = vmul.f32 %v1383, %v1409
    %v1413 = vmul.f32 %v1385, %v1409
    %v1414 = vmul.f32 %v1387, %v1409
    %v1415 = vmul.f32 %v1389, %v1409
    %v1416 = vmul.f32 %v1391, %v1409
    %v1417 = vmul.f32 %v1393, %v1409
    %v1418 = vsel %vm1354, %v1410, 0.0
    %1419 = vadd.xlane.f32.xlu0 %v1418
    %v1420 = vpop.xlane.xlu0 %1419
    %v1421 = vsel %vm1354, %v1411, 0.0
    %1422 = vadd.xlane.f32.xlu0 %v1421
    %v1423 = vpop.xlane.xlu0 %1422
    %v1424 = vsel %vm1354, %v1412, 0.0
    %1425 = vadd.xlane.f32.xlu0 %v1424
    %v1426 = vpop.xlane.xlu0 %1425
    %v1427 = vsel %vm1354, %v1413, 0.0
    %1428 = vadd.xlane.f32.xlu0 %v1427
    %v1429 = vpop.xlane.xlu0 %1428
    %v1430 = vsel %vm1354, %v1414, 0.0
    %1431 = vadd.xlane.f32.xlu0 %v1430
    %v1432 = vpop.xlane.xlu0 %1431
    %v1433 = vsel %vm1354, %v1415, 0.0
    %1434 = vadd.xlane.f32.xlu0 %v1433
    %v1435 = vpop.xlane.xlu0 %1434
    %v1436 = vsel %vm1354, %v1416, 0.0
    %1437 = vadd.xlane.f32.xlu0 %v1436
    %v1438 = vpop.xlane.xlu0 %1437
    %v1439 = vsel %vm1354, %v1417, 0.0
    %1440 = vadd.xlane.f32.xlu0 %v1439
    %v1441 = vpop.xlane.xlu0 %1440
    %v1442 = vmul.f32 %v1420, 0.16666667
    %v1443 = vmul.f32 %v1423, 0.16666667
    %v1444 = vmul.f32 %v1426, 0.16666667
    %v1445 = vmul.f32 %v1429, 0.16666667
    %v1446 = vmul.f32 %v1432, 0.16666667
    %v1447 = vmul.f32 %v1435, 0.16666667
    %v1448 = vmul.f32 %v1438, 0.16666667
    %v1449 = vmul.f32 %v1441, 0.16666667
    %v1450 = vcombine.high %v1106, %v1106
    %v1452 = vunpack.c.l.s4 1983009808
    %v1453 = vunpack.c.0.s8 %v1452
    %v1454 = vlaneseq
    %v1455 = vshrl.u32 %v1454, 7
    %v1456 = vsub.s32 %v1453, %v1455
    %v1457 = vrot.slane %v1106, %v1456
    %v1459 = vunpack.c.l.s4 1983009808
    %v1460 = vunpack.c.0.s8 %v1459
    %v1461 = vlaneseq
    %v1462 = vshrl.u32 %v1461, 7
    %v1463 = vsub.s32 %v1460, %v1462
    %v1464 = vrot.slane %v1450, %v1463
    %v1465 = vcombine.high %v1457, %v1457
    %v1466 = vcombine.high %v1464, %v1464
    %v1467 = vcombine.high %v1107, %v1107
    %v1469 = vunpack.c.l.s4 1983009808
    %v1470 = vunpack.c.0.s8 %v1469
    %v1471 = vlaneseq
    %v1472 = vshrl.u32 %v1471, 7
    %v1473 = vsub.s32 %v1470, %v1472
    %v1474 = vrot.slane %v1107, %v1473
    %v1476 = vunpack.c.l.s4 1983009808
    %v1477 = vunpack.c.0.s8 %v1476
    %v1478 = vlaneseq
    %v1479 = vshrl.u32 %v1478, 7
    %v1480 = vsub.s32 %v1477, %v1479
    %v1481 = vrot.slane %v1467, %v1480
    %v1482 = vcombine.high %v1474, %v1474
    %v1483 = vcombine.high %v1481, %v1481
    %v1492 = vmul.f32 %v1442, %v1457
    %v1493 = vmul.f32 %v1443, %v1465
    %v1494 = vmul.f32 %v1444, %v1464
    %v1495 = vmul.f32 %v1445, %v1466
    %v1496 = vmul.f32 %v1446, %v1474
    %v1497 = vmul.f32 %v1447, %v1482
    %v1498 = vmul.f32 %v1448, %v1481
    %v1499 = vmul.f32 %v1449, %v1483
    %vm1500 = vcmask 254976
    %v1501 = vsel %vm1500, %v1492, 0.0
    %v1502 = vsel %vm1500, %v1493, 0.0
    %v1503 = vadd.f32 %v1501, %v1502
    %v1504 = vsel %vm1500, %v1494, 0.0
    %v1505 = vadd.f32 %v1503, %v1504
    %v1506 = vsel %vm1500, %v1495, 0.0
    %v1507 = vadd.f32 %v1505, %v1506
    %v1508 = vsel %vm1500, %v1496, 0.0
    %v1509 = vadd.f32 %v1507, %v1508
    %v1510 = vsel %vm1500, %v1497, 0.0
    %v1511 = vadd.f32 %v1509, %v1510
    %v1512 = vsel %vm1500, %v1498, 0.0
    %v1513 = vadd.f32 %v1511, %v1512
    %v1514 = vsel %vm1500, %v1499, 0.0
    %v1515 = vadd.f32 %v1513, %v1514
    %1516 = vst.msk [vmem:[#allocation11] sm:$0x3] %vm1500, %v1515
    // Predicated region
    $region50: #{sent_att_net_forward.1} parent=1 // pred_check
      _
    $region51: #{sent_att_net_forward.1} parent=1 // pred_check_branch
      %1518 = sbr.rel (0) target = $region53
    $region52: #{sent_att_net_forward.1} parent=1 // pred_region
      %s1520 = ssub.s32 32, 32
      %1521 = vsyncadd [#allocation5], %s1520
      %s1523 = sshll.u32 [#allocation11], 4
      %s1524 = int_to_ptr.vmem [resolvable:$true] %s1523
      %1526 = dma.vmem_to_hbm [thread:$0]  %s1524, 32, %s8, [#allocation5]
    $region53: #{sent_att_net_forward.1} parent=1 // pred_fallthru
      _
    // Predicated region
    $region54: #{sent_att_net_forward.1} parent=1 // pred_check
      _
    $region55: #{sent_att_net_forward.1} parent=1 // pred_check_branch
      %1528 = sbr.rel (0) target = $region57
    $region56: #{sent_att_net_forward.1} parent=1 // pred_region
      %s1530 = ssub.s32 64, 64
      %1531 = vsyncadd [#allocation13], %s1530
      %s1532 = sshll.u32 [#allocation12], 4
      %s1533 = int_to_ptr.vmem [resolvable:$true] %s1532
      %1538 = dma.vmem_to_hbm [thread:$0]  %s1533, 64, %s9, [#allocation13], 32, 32, 2
    $region57: #{sent_att_net_forward.1} parent=1 // pred_fallthru
      _
    // Predicated region
    $region58: #{sent_att_net_forward.1} parent=1 // pred_check
      _
    $region59: #{sent_att_net_forward.1} parent=1 // pred_check_branch
      %1540 = sbr.rel (0) target = $region61
    $region60: #{sent_att_net_forward.1} parent=1 // pred_region
      %1541 = dma.done [#allocation5], 32
    $region61: #{sent_att_net_forward.1} parent=1 // pred_fallthru
      _
    // Predicated region
    $region62: #{sent_att_net_forward.1} parent=1 // pred_check
      _
    $region63: #{sent_att_net_forward.1} parent=1 // pred_check_branch
      %1543 = sbr.rel (0) target = $region65
    $region64: #{sent_att_net_forward.1} parent=1 // pred_region
      %1544 = dma.done [#allocation13], 64
    $region65: #{sent_att_net_forward.1} parent=1 // pred_fallthru
      _
    %1545 = vsyncpa [#allocation4], 1
    %1546 = vsyncpa [#allocation7], 1
    %1547 = vsyncpa [#allocation10], 1
    %1548 = vsyncpa [#allocation5], 1
    %1549 = vsyncpa [#allocation13], 1

</llo_original>
